<compile_context>
chip_gen: v6e
topology: v6e:2x2x1
jax: 0.10.0
libtpu: 0.0.40
codegen_flags: <defaults>
</compile_context>

<pallas_src>
import numpy as np
import jax
import jax.numpy as jnp
from jax import lax
from jax.experimental import pallas as pl
from jax.experimental.pallas import tpu as pltpu

NEG = -1.0e30   # finite stand-in for -inf (keeps log-sum-exp NaN-free)
BATCH_BLOCK = 8  # samples per grid step == f32 sublane count of one vreg


def _ctc_kernel(logits_ref, ext_ref, skip_ref, final_ref, o_ref, e_ref):
    """CTC negative log-likelihood for a block of B batch items.

    logits_ref : (B, T, C)      raw logits
    ext_ref    : (B, 1, S_pad)  blank-extended target labels (int32)
    skip_ref   : (B, S_pad)     1.0 where the s-2 "skip" transition is legal
    final_ref  : (B, S_pad)     1.0 at the two terminal positions (2L-1, 2L)
    o_ref      : (B, 128)       per-sample NLL broadcast over lanes (lane-dense)
    e_ref      : (B, T, S_pad)  scratch: emission log-probs E[b, t, s]
    """
    B, T, C = logits_ref.shape
    S_pad = skip_ref.shape[-1]

    # ---- log-softmax over classes, batched over (B, T)  (VPU / EUP) ----
    x = logits_ref[...]                                          # (B, T, C)
    m = jnp.max(x, axis=-1, keepdims=True)
    lse = m + jnp.log(jnp.sum(jnp.exp(x - m), axis=-1, keepdims=True))
    logp = x - lse                                               # (B, T, C)

    # ---- one-hot of the blank-extended labels, built in-kernel ----
    # onehot[b, c, s] = (c == ext[b, s]); no dense one-hot is read from HBM.
    # TODO(synk): for very large class counts (CJK ~7k) this (B, C, S_pad)
    # intermediate should be tiled over C.
    cls = lax.broadcasted_iota(jnp.int32, (B, C, S_pad), 1)
    onehot = (cls == ext_ref[...]).astype(jnp.float32)           # (B, C, S_pad)

    # ---- emission log-probs E[b, t, s] = logp[b, t, ext[b, s]]  (MXU) ----
    e_ref[...] = jnp.einsum("btc,bcs->bts", logp, onehot,
                            preferred_element_type=jnp.float32)

    # ---- CTC forward recursion: all B samples live in the sublanes ----
    pos = lax.broadcasted_iota(jnp.int32, (B, S_pad), 1)
    neg = jnp.full((B, S_pad), NEG, jnp.float32)                 # hoisted
    mask1 = pos >= 1                      # s-1 transition legal
    skip = skip_ref[...] > 0.5            # s-2 transition legal (mask has s>=2)

    def step(alpha, e_t):
        a1 = jnp.where(mask1, pltpu.roll(alpha, 1, axis=1), neg)
        a2 = jnp.where(skip, pltpu.roll(alpha, 2, axis=1), neg)
        mm = jnp.maximum(jnp.maximum(alpha, a1), a2)
        # Note: lanes where alpha == a1 == a2 == NEG pick up +log(3) per step;
        # they stay ~NEG and are masked out by `final`, so it is harmless.
        return mm + jnp.log(jnp.exp(alpha - mm) + jnp.exp(a1 - mm)
                            + jnp.exp(a2 - mm)) + e_t

    # alpha_0: only positions {0, 1} are reachable at t = 0
    alpha = jnp.where(pos <= 1, e_ref[:, 0, :], neg)

    if T <= 64:
        # fully unrolled recursion: static indices let the LLO scheduler
        # overlap the e-row loads, XLU rolls and EUP exp/log across steps.
        for t in range(1, T):
            alpha = step(alpha, e_ref[:, t, :])
    else:
        # TODO(synk): for very long T a larger unroll / chunked e loads could
        # be used; partial unroll of 8 keeps compile time bounded.
        alpha = lax.fori_loop(1, T, lambda t, a: step(a, e_ref[:, t, :]),
                              alpha, unroll=8)

    # ---- log-likelihood over the two terminal positions ----
    fin = jnp.where(final_ref[...] > 0.5, alpha, neg)            # (B, S_pad)
    fm = jnp.max(fin, axis=-1, keepdims=True)
    ll = fm + jnp.log(jnp.sum(jnp.exp(fin - fm), axis=-1, keepdims=True))
    o_ref[...] = jnp.broadcast_to(-ll, o_ref.shape)              # (B, 128)


def ctc_loss_pallas(logits, flatten_targets, target_lengths, blank=0,
                    reduction="mean"):
    """Equivalent of CTCLoss.forward(outputs, targets_dict)['loss_ctc']."""
    logits = jnp.asarray(logits, jnp.float32)
    N, T, C = logits.shape
    B = BATCH_BLOCK
    N_pad = ((N + B - 1) // B) * B

    # torch.clamp(target_lengths, min=1, max=seq_len).long()
    tl = np.clip(np.asarray(target_lengths), 1, T).astype(np.int32)
    ft = np.asarray(flatten_targets).astype(np.int32)
    if ft.size == 0:
        ft = np.full((1,), blank, np.int32)

    L_max = int(tl.max())
    S = 2 * L_max + 1
    S_pad = max(128, ((S + 127) // 128) * 128)

    # ---- host prep: all vectorized numpy (no Python loops over the batch) ----
    offsets = np.concatenate([[0], np.cumsum(tl)[:-1]]).astype(np.int64)
    j = np.arange(L_max)[None, :]
    valid = j < tl[:, None]
    gidx = np.minimum(offsets[:, None] + j, ft.size - 1)
    padded = np.where(valid, ft[gidx], blank).astype(np.int32)    # (N, L_max)

    ext = np.full((N, S_pad), blank, np.int32)                    # extended seq
    ext[:, 1:2 * L_max:2] = padded                                # odd = labels

    pos = np.arange(S_pad)[None, :]
    ext_m2 = np.concatenate([np.full((N, 2), blank, np.int32), ext[:, :-2]], 1)
    skip = ((pos >= 2) & (ext != blank) & (ext != ext_m2)).astype(np.float32)
    final = ((pos == 2 * tl[:, None]) |
             (pos == 2 * tl[:, None] - 1)).astype(np.float32)

    # pad batch to a multiple of B; dummy rows are dropped after the kernel
    pad = N_pad - N
    if pad:
        ext = np.pad(ext, ((0, pad), (0, 0)), mode="edge")
        skip = np.pad(skip, ((0, pad), (0, 0)), mode="edge")
        final = np.pad(final, ((0, pad), (0, 0)), mode="edge")
        logits = jnp.pad(logits, ((0, pad), (0, 0), (0, 0)))

    ext3 = ext[:, None, :]                                        # (N_pad,1,S_pad)

    LANES = 128
    nll = pl.pallas_call(
        _ctc_kernel,
        out_shape=jax.ShapeDtypeStruct((N_pad, LANES), jnp.float32),
        grid_spec=pltpu.PrefetchScalarGridSpec(
            num_scalar_prefetch=0,
            grid=(N_pad // B,),
            in_specs=[
                pl.BlockSpec((B, T, C), lambda i: (i, 0, 0)),
                pl.BlockSpec((B, 1, S_pad), lambda i: (i, 0, 0)),
                pl.BlockSpec((B, S_pad), lambda i: (i, 0)),
                pl.BlockSpec((B, S_pad), lambda i: (i, 0)),
            ],
            out_specs=pl.BlockSpec((B, LANES), lambda i: (i, 0)),
            scratch_shapes=[pltpu.VMEM((B, T, S_pad), jnp.float32)],
        ),
        compiler_params=pltpu.CompilerParams(
            dimension_semantics=("parallel",)),   # batch blocks are independent
    )(logits, jnp.asarray(ext3), jnp.asarray(skip), jnp.asarray(final))

    nll = nll[:N, 0]                              # per-sample NLL, shape (N,)
    # Unreachable alignments (input too short for the target) -> +inf, matching
    # torch's zero_infinity=False behaviour (the DP leaves those at ~1e30).
    nll = jnp.where(nll > 1e29, jnp.inf, nll)

    tl_j = jnp.asarray(tl, jnp.float32)
    if reduction == "mean":       # torch 'mean': mean_b(loss_b / target_len_b)
        loss = jnp.mean(nll / tl_j)
    elif reduction == "sum":
        loss = jnp.sum(nll)
    else:
        loss = nll
    # TODO(synk): flatten=False + img_metas valid_ratio input_lengths path not
    # implemented (module defaults use flatten=True and full input_lengths).
    return {"loss_ctc": loss}


def ctc_loss_ref(logits, flatten_targets, target_lengths, blank=0):
    """Independent numpy (float64) CTC reference, reduction='mean'."""
    logits = np.asarray(logits, np.float64)
    N, T, C = logits.shape
    tl = np.clip(np.asarray(target_lengths), 1, T).astype(np.int64)
    ft = np.asarray(flatten_targets)
    offsets = np.concatenate([[0], np.cumsum(tl)[:-1]])
    losses = []
    for b in range(N):
        x = logits[b]
        m = x.max(axis=-1, keepdims=True)
        lp = x - (m + np.log(np.exp(x - m).sum(axis=-1, keepdims=True)))
        L = int(tl[b])
        y = ft[offsets[b]:offsets[b] + L]
        ext = [blank]
        for c in y:
            ext += [int(c), blank]
        S = len(ext)
        alpha = np.full((S,), -np.inf)
        alpha[0] = lp[0, ext[0]]
        alpha[1] = lp[0, ext[1]]
        for t in range(1, T):
            new = np.full((S,), -np.inf)
            for s in range(S):
                v = alpha[s]
                if s >= 1:
                    v = np.logaddexp(v, alpha[s - 1])
                if s >= 2 and ext[s] != blank and ext[s] != ext[s - 2]:
                    v = np.logaddexp(v, alpha[s - 2])
                new[s] = v + lp[t, ext[s]]
            alpha = new
        losses.append(-np.logaddexp(alpha[S - 1], alpha[S - 2]))
    losses = np.array(losses)
    return float(np.mean(losses / tl))


if __name__ == "__main__":
    key = jax.random.PRNGKey(0)
    N, T, C = 2, 16, 32                 # batch, seq_len, num classes (blank=0)
    k1, k2 = jax.random.split(key)
    logits = jax.random.normal(k1, (N, T, C), jnp.float32)
    target_lengths = np.array([4, 5], dtype=np.int32)
    total = int(target_lengths.sum())
    flatten_targets = np.asarray(jax.random.randint(k2, (total,), 1, C))

    losses = ctc_loss_pallas(logits, flatten_targets, target_lengths)
    loss = jax.block_until_ready(losses["loss_ctc"])

    ref = ctc_loss_ref(np.asarray(logits), flatten_targets, target_lengths)
    assert np.isfinite(float(loss))
    np.testing.assert_allclose(float(loss), ref, rtol=2e-3, atol=2e-3)
    print("KERNEL_OK")
</pallas_src>

<mosaic_0001>
module attributes {stable_mosaic.version = 11 : i64} {
  func.func @_ctc_kernel(%arg0: i32, %arg1: memref<8x16x32xf32, #tpu.memory_space<vmem>>, %arg2: memref<8x1x128xi32, #tpu.memory_space<vmem>>, %arg3: memref<8x128xf32, #tpu.memory_space<vmem>>, %arg4: memref<8x128xf32, #tpu.memory_space<vmem>>, %arg5: memref<8x128xf32, #tpu.memory_space<vmem>>, %arg6: memref<8x16x128xf32, #tpu.memory_space<vmem>>) attributes {dimension_semantics = [#tpu.dimension_semantics<parallel>], iteration_bounds = array<i64: 1>, scalar_prefetch = 0 : i64, scratch_operands = 1 : i64, tpu.core_type = #tpu.core_type<tc>, window_params = [{transform_indices = @transform_0, window_bounds = array<i64: 8, 16, 32>}, {transform_indices = @transform_1, window_bounds = array<i64: 8, 1, 128>}, {transform_indices = @transform_2, window_bounds = array<i64: 8, 128>}, {transform_indices = @transform_3, window_bounds = array<i64: 8, 128>}, {transform_indices = @transform_4, window_bounds = array<i64: 8, 128>}]} {
    %c0 = arith.constant 0 : index
    %c0_0 = arith.constant 0 : index
    %c0_1 = arith.constant 0 : index
    %0 = vector.load %arg1[%c0, %c0_0, %c0_1] : memref<8x16x32xf32, #tpu.memory_space<vmem>>, vector<8x16x32xf32>
    %cst = arith.constant dense<0xFF800000> : vector<8x16xf32>
    %1 = vector.multi_reduction <maximumf>, %0, %cst [2] : vector<8x16x32xf32> to vector<8x16xf32>
    %2 = vector.shape_cast %1 : vector<8x16xf32> to vector<8x16x1xf32>
    %3 = vector.broadcast %2 : vector<8x16x1xf32> to vector<8x16x32xf32>
    %4 = arith.subf %0, %3 : vector<8x16x32xf32>
    %5 = math.exp %4 : vector<8x16x32xf32>
    %cst_2 = arith.constant dense<0.000000e+00> : vector<8x16xf32>
    %6 = vector.multi_reduction <add>, %5, %cst_2 [2] : vector<8x16x32xf32> to vector<8x16xf32>
    %7 = vector.shape_cast %6 : vector<8x16xf32> to vector<8x16x1xf32>
    %8 = math.log %7 : vector<8x16x1xf32>
    %9 = arith.addf %2, %8 : vector<8x16x1xf32>
    %10 = vector.broadcast %9 : vector<8x16x1xf32> to vector<8x16x32xf32>
    %11 = arith.subf %0, %10 : vector<8x16x32xf32>
    %12 = tpu.iota {dimensions = array<i32: 1>} : vector<8x32x128xi32>
    %c0_3 = arith.constant 0 : index
    %c0_4 = arith.constant 0 : index
    %c0_5 = arith.constant 0 : index
    %13 = vector.load %arg2[%c0_3, %c0_4, %c0_5] : memref<8x1x128xi32, #tpu.memory_space<vmem>>, vector<8x1x128xi32>
    %14 = vector.broadcast %13 : vector<8x1x128xi32> to vector<8x32x128xi32>
    %15 = arith.cmpi eq, %12, %14 : vector<8x32x128xi32>
    %16 = arith.extui %15 : vector<8x32x128xi1> to vector<8x32x128xi32>
    %17 = arith.sitofp %16 : vector<8x32x128xi32> to vector<8x32x128xf32>
    "tpu.trace_start"() <{level = 10 : i32, message = "btc,bcs->bts"}> : () -> ()
    %cst_6 = arith.constant dense<0.000000e+00> : vector<8x16x128xf32>
    %18 = tpu.matmul %11, %17, %cst_6 {dimension_numbers = #tpu.dot_dimension_numbers<[2], [1], [1], [2], [0, 0, 0, 1, 1, 2], [0], [0]>} : vector<8x16x32xf32>, vector<8x32x128xf32>, vector<8x16x128xf32> -> vector<8x16x128xf32>
    "tpu.trace_stop"() : () -> ()
    %c0_7 = arith.constant 0 : index
    %c0_8 = arith.constant 0 : index
    %c0_9 = arith.constant 0 : index
    %19 = vector.load %arg6[%c0_7, %c0_8, %c0_9] : memref<8x16x128xf32, #tpu.memory_space<vmem>>, vector<8x16x128xf32>
    tpu.vector_store %arg6[%c0_7, %c0_8, %c0_9], %18 {strides = array<i32>} : memref<8x16x128xf32, #tpu.memory_space<vmem>>, vector<8x16x128xf32>,
    %20 = tpu.iota {dimensions = array<i32: 1>} : vector<8x128xi32>
    %cst_10 = arith.constant -1.000000e+30 : f32
    %21 = vector.broadcast %cst_10 : f32 to vector<8x128xf32>
    %c1_i32 = arith.constant 1 : i32
    %22 = vector.broadcast %c1_i32 : i32 to vector<8x128xi32>
    %23 = arith.cmpi sge, %20, %22 : vector<8x128xi32>
    %c0_11 = arith.constant 0 : index
    %c0_12 = arith.constant 0 : index
    %24 = vector.load %arg3[%c0_11, %c0_12] : memref<8x128xf32, #tpu.memory_space<vmem>>, vector<8x128xf32>
    %cst_13 = arith.constant 5.000000e-01 : f32
    %25 = vector.broadcast %cst_13 : f32 to vector<8x128xf32>
    %26 = arith.cmpf ogt, %24, %25 : vector<8x128xf32>
    %c1_i32_14 = arith.constant 1 : i32
    %27 = vector.broadcast %c1_i32_14 : i32 to vector<8x128xi32>
    %28 = arith.cmpi sle, %20, %27 : vector<8x128xi32>
    %c0_15 = arith.constant 0 : index
    %c0_16 = arith.constant 0 : index
    %c0_17 = arith.constant 0 : index
    %29 = vector.load %arg6[%c0_15, %c0_16, %c0_17] : memref<8x16x128xf32, #tpu.memory_space<vmem>>, vector<8x1x128xf32>
    %30 = vector.shape_cast %29 : vector<8x1x128xf32> to vector<8x128xf32>
    %31 = arith.select %28, %30, %21 : vector<8x128xi1>, vector<8x128xf32>
    %c0_18 = arith.constant 0 : index
    %c1 = arith.constant 1 : index
    %c0_19 = arith.constant 0 : index
    %32 = vector.load %arg6[%c0_18, %c1, %c0_19] : memref<8x16x128xf32, #tpu.memory_space<vmem>>, vector<8x1x128xf32>
    %33 = vector.shape_cast %32 : vector<8x1x128xf32> to vector<8x128xf32>
    %c1_i32_20 = arith.constant 1 : i32
    %34 = tpu.dynamic_rotate %31 by %c1_i32_20 dim 1 : vector<8x128xf32>, i32 -> vector<8x128xf32>
    %35 = arith.select %23, %34, %21 : vector<8x128xi1>, vector<8x128xf32>
    %c2_i32 = arith.constant 2 : i32
    %36 = tpu.dynamic_rotate %31 by %c2_i32 dim 1 : vector<8x128xf32>, i32 -> vector<8x128xf32>
    %37 = arith.select %26, %36, %21 : vector<8x128xi1>, vector<8x128xf32>
    %38 = arith.maximumf %31, %35 : vector<8x128xf32>
    %39 = arith.maximumf %38, %37 : vector<8x128xf32>
    %40 = arith.subf %31, %39 : vector<8x128xf32>
    %41 = math.exp %40 : vector<8x128xf32>
    %42 = arith.subf %35, %39 : vector<8x128xf32>
    %43 = math.exp %42 : vector<8x128xf32>
    %44 = arith.addf %41, %43 : vector<8x128xf32>
    %45 = arith.subf %37, %39 : vector<8x128xf32>
    %46 = math.exp %45 : vector<8x128xf32>
    %47 = arith.addf %44, %46 : vector<8x128xf32>
    %48 = math.log %47 : vector<8x128xf32>
    %49 = arith.addf %39, %48 : vector<8x128xf32>
    %50 = arith.addf %49, %33 : vector<8x128xf32>
    %c0_21 = arith.constant 0 : index
    %c2 = arith.constant 2 : index
    %c0_22 = arith.constant 0 : index
    %51 = vector.load %arg6[%c0_21, %c2, %c0_22] : memref<8x16x128xf32, #tpu.memory_space<vmem>>, vector<8x1x128xf32>
    %52 = vector.shape_cast %51 : vector<8x1x128xf32> to vector<8x128xf32>
    %c1_i32_23 = arith.constant 1 : i32
    %53 = tpu.dynamic_rotate %50 by %c1_i32_23 dim 1 : vector<8x128xf32>, i32 -> vector<8x128xf32>
    %54 = arith.select %23, %53, %21 : vector<8x128xi1>, vector<8x128xf32>
    %c2_i32_24 = arith.constant 2 : i32
    %55 = tpu.dynamic_rotate %50 by %c2_i32_24 dim 1 : vector<8x128xf32>, i32 -> vector<8x128xf32>
    %56 = arith.select %26, %55, %21 : vector<8x128xi1>, vector<8x128xf32>
    %57 = arith.maximumf %50, %54 : vector<8x128xf32>
    %58 = arith.maximumf %57, %56 : vector<8x128xf32>
    %59 = arith.subf %50, %58 : vector<8x128xf32>
    %60 = math.exp %59 : vector<8x128xf32>
    %61 = arith.subf %54, %58 : vector<8x128xf32>
    %62 = math.exp %61 : vector<8x128xf32>
    %63 = arith.addf %60, %62 : vector<8x128xf32>
    %64 = arith.subf %56, %58 : vector<8x128xf32>
    %65 = math.exp %64 : vector<8x128xf32>
    %66 = arith.addf %63, %65 : vector<8x128xf32>
    %67 = math.log %66 : vector<8x128xf32>
    %68 = arith.addf %58, %67 : vector<8x128xf32>
    %69 = arith.addf %68, %52 : vector<8x128xf32>
    %c0_25 = arith.constant 0 : index
    %c3 = arith.constant 3 : index
    %c0_26 = arith.constant 0 : index
    %70 = vector.load %arg6[%c0_25, %c3, %c0_26] : memref<8x16x128xf32, #tpu.memory_space<vmem>>, vector<8x1x128xf32>
    %71 = vector.shape_cast %70 : vector<8x1x128xf32> to vector<8x128xf32>
    %c1_i32_27 = arith.constant 1 : i32
    %72 = tpu.dynamic_rotate %69 by %c1_i32_27 dim 1 : vector<8x128xf32>, i32 -> vector<8x128xf32>
    %73 = arith.select %23, %72, %21 : vector<8x128xi1>, vector<8x128xf32>
    %c2_i32_28 = arith.constant 2 : i32
    %74 = tpu.dynamic_rotate %69 by %c2_i32_28 dim 1 : vector<8x128xf32>, i32 -> vector<8x128xf32>
    %75 = arith.select %26, %74, %21 : vector<8x128xi1>, vector<8x128xf32>
    %76 = arith.maximumf %69, %73 : vector<8x128xf32>
    %77 = arith.maximumf %76, %75 : vector<8x128xf32>
    %78 = arith.subf %69, %77 : vector<8x128xf32>
    %79 = math.exp %78 : vector<8x128xf32>
    %80 = arith.subf %73, %77 : vector<8x128xf32>
    %81 = math.exp %80 : vector<8x128xf32>
    %82 = arith.addf %79, %81 : vector<8x128xf32>
    %83 = arith.subf %75, %77 : vector<8x128xf32>
    %84 = math.exp %83 : vector<8x128xf32>
    %85 = arith.addf %82, %84 : vector<8x128xf32>
    %86 = math.log %85 : vector<8x128xf32>
    %87 = arith.addf %77, %86 : vector<8x128xf32>
    %88 = arith.addf %87, %71 : vector<8x128xf32>
    %c0_29 = arith.constant 0 : index
    %c4 = arith.constant 4 : index
    %c0_30 = arith.constant 0 : index
    %89 = vector.load %arg6[%c0_29, %c4, %c0_30] : memref<8x16x128xf32, #tpu.memory_space<vmem>>, vector<8x1x128xf32>
    %90 = vector.shape_cast %89 : vector<8x1x128xf32> to vector<8x128xf32>
    %c1_i32_31 = arith.constant 1 : i32
    %91 = tpu.dynamic_rotate %88 by %c1_i32_31 dim 1 : vector<8x128xf32>, i32 -> vector<8x128xf32>
    %92 = arith.select %23, %91, %21 : vector<8x128xi1>, vector<8x128xf32>
    %c2_i32_32 = arith.constant 2 : i32
    %93 = tpu.dynamic_rotate %88 by %c2_i32_32 dim 1 : vector<8x128xf32>, i32 -> vector<8x128xf32>
    %94 = arith.select %26, %93, %21 : vector<8x128xi1>, vector<8x128xf32>
    %95 = arith.maximumf %88, %92 : vector<8x128xf32>
    %96 = arith.maximumf %95, %94 : vector<8x128xf32>
    %97 = arith.subf %88, %96 : vector<8x128xf32>
    %98 = math.exp %97 : vector<8x128xf32>
    %99 = arith.subf %92, %96 : vector<8x128xf32>
    %100 = math.exp %99 : vector<8x128xf32>
    %101 = arith.addf %98, %100 : vector<8x128xf32>
    %102 = arith.subf %94, %96 : vector<8x128xf32>
    %103 = math.exp %102 : vector<8x128xf32>
    %104 = arith.addf %101, %103 : vector<8x128xf32>
    %105 = math.log %104 : vector<8x128xf32>
    %106 = arith.addf %96, %105 : vector<8x128xf32>
    %107 = arith.addf %106, %90 : vector<8x128xf32>
    %c0_33 = arith.constant 0 : index
    %c5 = arith.constant 5 : index
    %c0_34 = arith.constant 0 : index
    %108 = vector.load %arg6[%c0_33, %c5, %c0_34] : memref<8x16x128xf32, #tpu.memory_space<vmem>>, vector<8x1x128xf32>
    %109 = vector.shape_cast %108 : vector<8x1x128xf32> to vector<8x128xf32>
    %c1_i32_35 = arith.constant 1 : i32
    %110 = tpu.dynamic_rotate %107 by %c1_i32_35 dim 1 : vector<8x128xf32>, i32 -> vector<8x128xf32>
    %111 = arith.select %23, %110, %21 : vector<8x128xi1>, vector<8x128xf32>
    %c2_i32_36 = arith.constant 2 : i32
    %112 = tpu.dynamic_rotate %107 by %c2_i32_36 dim 1 : vector<8x128xf32>, i32 -> vector<8x128xf32>
    %113 = arith.select %26, %112, %21 : vector<8x128xi1>, vector<8x128xf32>
    %114 = arith.maximumf %107, %111 : vector<8x128xf32>
    %115 = arith.maximumf %114, %113 : vector<8x128xf32>
    %116 = arith.subf %107, %115 : vector<8x128xf32>
    %117 = math.exp %116 : vector<8x128xf32>
    %118 = arith.subf %111, %115 : vector<8x128xf32>
    %119 = math.exp %118 : vector<8x128xf32>
    %120 = arith.addf %117, %119 : vector<8x128xf32>
    %121 = arith.subf %113, %115 : vector<8x128xf32>
    %122 = math.exp %121 : vector<8x128xf32>
    %123 = arith.addf %120, %122 : vector<8x128xf32>
    %124 = math.log %123 : vector<8x128xf32>
    %125 = arith.addf %115, %124 : vector<8x128xf32>
    %126 = arith.addf %125, %109 : vector<8x128xf32>
    %c0_37 = arith.constant 0 : index
    %c6 = arith.constant 6 : index
    %c0_38 = arith.constant 0 : index
    %127 = vector.load %arg6[%c0_37, %c6, %c0_38] : memref<8x16x128xf32, #tpu.memory_space<vmem>>, vector<8x1x128xf32>
    %128 = vector.shape_cast %127 : vector<8x1x128xf32> to vector<8x128xf32>
    %c1_i32_39 = arith.constant 1 : i32
    %129 = tpu.dynamic_rotate %126 by %c1_i32_39 dim 1 : vector<8x128xf32>, i32 -> vector<8x128xf32>
    %130 = arith.select %23, %129, %21 : vector<8x128xi1>, vector<8x128xf32>
    %c2_i32_40 = arith.constant 2 : i32
    %131 = tpu.dynamic_rotate %126 by %c2_i32_40 dim 1 : vector<8x128xf32>, i32 -> vector<8x128xf32>
    %132 = arith.select %26, %131, %21 : vector<8x128xi1>, vector<8x128xf32>
    %133 = arith.maximumf %126, %130 : vector<8x128xf32>
    %134 = arith.maximumf %133, %132 : vector<8x128xf32>
    %135 = arith.subf %126, %134 : vector<8x128xf32>
    %136 = math.exp %135 : vector<8x128xf32>
    %137 = arith.subf %130, %134 : vector<8x128xf32>
    %138 = math.exp %137 : vector<8x128xf32>
    %139 = arith.addf %136, %138 : vector<8x128xf32>
    %140 = arith.subf %132, %134 : vector<8x128xf32>
    %141 = math.exp %140 : vector<8x128xf32>
    %142 = arith.addf %139, %141 : vector<8x128xf32>
    %143 = math.log %142 : vector<8x128xf32>
    %144 = arith.addf %134, %143 : vector<8x128xf32>
    %145 = arith.addf %144, %128 : vector<8x128xf32>
    %c0_41 = arith.constant 0 : index
    %c7 = arith.constant 7 : index
    %c0_42 = arith.constant 0 : index
    %146 = vector.load %arg6[%c0_41, %c7, %c0_42] : memref<8x16x128xf32, #tpu.memory_space<vmem>>, vector<8x1x128xf32>
    %147 = vector.shape_cast %146 : vector<8x1x128xf32> to vector<8x128xf32>
    %c1_i32_43 = arith.constant 1 : i32
    %148 = tpu.dynamic_rotate %145 by %c1_i32_43 dim 1 : vector<8x128xf32>, i32 -> vector<8x128xf32>
    %149 = arith.select %23, %148, %21 : vector<8x128xi1>, vector<8x128xf32>
    %c2_i32_44 = arith.constant 2 : i32
    %150 = tpu.dynamic_rotate %145 by %c2_i32_44 dim 1 : vector<8x128xf32>, i32 -> vector<8x128xf32>
    %151 = arith.select %26, %150, %21 : vector<8x128xi1>, vector<8x128xf32>
    %152 = arith.maximumf %145, %149 : vector<8x128xf32>
    %153 = arith.maximumf %152, %151 : vector<8x128xf32>
    %154 = arith.subf %145, %153 : vector<8x128xf32>
    %155 = math.exp %154 : vector<8x128xf32>
    %156 = arith.subf %149, %153 : vector<8x128xf32>
    %157 = math.exp %156 : vector<8x128xf32>
    %158 = arith.addf %155, %157 : vector<8x128xf32>
    %159 = arith.subf %151, %153 : vector<8x128xf32>
    %160 = math.exp %159 : vector<8x128xf32>
    %161 = arith.addf %158, %160 : vector<8x128xf32>
    %162 = math.log %161 : vector<8x128xf32>
    %163 = arith.addf %153, %162 : vector<8x128xf32>
    %164 = arith.addf %163, %147 : vector<8x128xf32>
    %c0_45 = arith.constant 0 : index
    %c8 = arith.constant 8 : index
    %c0_46 = arith.constant 0 : index
    %165 = vector.load %arg6[%c0_45, %c8, %c0_46] : memref<8x16x128xf32, #tpu.memory_space<vmem>>, vector<8x1x128xf32>
    %166 = vector.shape_cast %165 : vector<8x1x128xf32> to vector<8x128xf32>
    %c1_i32_47 = arith.constant 1 : i32
    %167 = tpu.dynamic_rotate %164 by %c1_i32_47 dim 1 : vector<8x128xf32>, i32 -> vector<8x128xf32>
    %168 = arith.select %23, %167, %21 : vector<8x128xi1>, vector<8x128xf32>
    %c2_i32_48 = arith.constant 2 : i32
    %169 = tpu.dynamic_rotate %164 by %c2_i32_48 dim 1 : vector<8x128xf32>, i32 -> vector<8x128xf32>
    %170 = arith.select %26, %169, %21 : vector<8x128xi1>, vector<8x128xf32>
    %171 = arith.maximumf %164, %168 : vector<8x128xf32>
    %172 = arith.maximumf %171, %170 : vector<8x128xf32>
    %173 = arith.subf %164, %172 : vector<8x128xf32>
    %174 = math.exp %173 : vector<8x128xf32>
    %175 = arith.subf %168, %172 : vector<8x128xf32>
    %176 = math.exp %175 : vector<8x128xf32>
    %177 = arith.addf %174, %176 : vector<8x128xf32>
    %178 = arith.subf %170, %172 : vector<8x128xf32>
    %179 = math.exp %178 : vector<8x128xf32>
    %180 = arith.addf %177, %179 : vector<8x128xf32>
    %181 = math.log %180 : vector<8x128xf32>
    %182 = arith.addf %172, %181 : vector<8x128xf32>
    %183 = arith.addf %182, %166 : vector<8x128xf32>
    %c0_49 = arith.constant 0 : index
    %c9 = arith.constant 9 : index
    %c0_50 = arith.constant 0 : index
    %184 = vector.load %arg6[%c0_49, %c9, %c0_50] : memref<8x16x128xf32, #tpu.memory_space<vmem>>, vector<8x1x128xf32>
    %185 = vector.shape_cast %184 : vector<8x1x128xf32> to vector<8x128xf32>
    %c1_i32_51 = arith.constant 1 : i32
    %186 = tpu.dynamic_rotate %183 by %c1_i32_51 dim 1 : vector<8x128xf32>, i32 -> vector<8x128xf32>
    %187 = arith.select %23, %186, %21 : vector<8x128xi1>, vector<8x128xf32>
    %c2_i32_52 = arith.constant 2 : i32
    %188 = tpu.dynamic_rotate %183 by %c2_i32_52 dim 1 : vector<8x128xf32>, i32 -> vector<8x128xf32>
    %189 = arith.select %26, %188, %21 : vector<8x128xi1>, vector<8x128xf32>
    %190 = arith.maximumf %183, %187 : vector<8x128xf32>
    %191 = arith.maximumf %190, %189 : vector<8x128xf32>
    %192 = arith.subf %183, %191 : vector<8x128xf32>
    %193 = math.exp %192 : vector<8x128xf32>
    %194 = arith.subf %187, %191 : vector<8x128xf32>
    %195 = math.exp %194 : vector<8x128xf32>
    %196 = arith.addf %193, %195 : vector<8x128xf32>
    %197 = arith.subf %189, %191 : vector<8x128xf32>
    %198 = math.exp %197 : vector<8x128xf32>
    %199 = arith.addf %196, %198 : vector<8x128xf32>
    %200 = math.log %199 : vector<8x128xf32>
    %201 = arith.addf %191, %200 : vector<8x128xf32>
    %202 = arith.addf %201, %185 : vector<8x128xf32>
    %c0_53 = arith.constant 0 : index
    %c10 = arith.constant 10 : index
    %c0_54 = arith.constant 0 : index
    %203 = vector.load %arg6[%c0_53, %c10, %c0_54] : memref<8x16x128xf32, #tpu.memory_space<vmem>>, vector<8x1x128xf32>
    %204 = vector.shape_cast %203 : vector<8x1x128xf32> to vector<8x128xf32>
    %c1_i32_55 = arith.constant 1 : i32
    %205 = tpu.dynamic_rotate %202 by %c1_i32_55 dim 1 : vector<8x128xf32>, i32 -> vector<8x128xf32>
    %206 = arith.select %23, %205, %21 : vector<8x128xi1>, vector<8x128xf32>
    %c2_i32_56 = arith.constant 2 : i32
    %207 = tpu.dynamic_rotate %202 by %c2_i32_56 dim 1 : vector<8x128xf32>, i32 -> vector<8x128xf32>
    %208 = arith.select %26, %207, %21 : vector<8x128xi1>, vector<8x128xf32>
    %209 = arith.maximumf %202, %206 : vector<8x128xf32>
    %210 = arith.maximumf %209, %208 : vector<8x128xf32>
    %211 = arith.subf %202, %210 : vector<8x128xf32>
    %212 = math.exp %211 : vector<8x128xf32>
    %213 = arith.subf %206, %210 : vector<8x128xf32>
    %214 = math.exp %213 : vector<8x128xf32>
    %215 = arith.addf %212, %214 : vector<8x128xf32>
    %216 = arith.subf %208, %210 : vector<8x128xf32>
    %217 = math.exp %216 : vector<8x128xf32>
    %218 = arith.addf %215, %217 : vector<8x128xf32>
    %219 = math.log %218 : vector<8x128xf32>
    %220 = arith.addf %210, %219 : vector<8x128xf32>
    %221 = arith.addf %220, %204 : vector<8x128xf32>
    %c0_57 = arith.constant 0 : index
    %c11 = arith.constant 11 : index
    %c0_58 = arith.constant 0 : index
    %222 = vector.load %arg6[%c0_57, %c11, %c0_58] : memref<8x16x128xf32, #tpu.memory_space<vmem>>, vector<8x1x128xf32>
    %223 = vector.shape_cast %222 : vector<8x1x128xf32> to vector<8x128xf32>
    %c1_i32_59 = arith.constant 1 : i32
    %224 = tpu.dynamic_rotate %221 by %c1_i32_59 dim 1 : vector<8x128xf32>, i32 -> vector<8x128xf32>
    %225 = arith.select %23, %224, %21 : vector<8x128xi1>, vector<8x128xf32>
    %c2_i32_60 = arith.constant 2 : i32
    %226 = tpu.dynamic_rotate %221 by %c2_i32_60 dim 1 : vector<8x128xf32>, i32 -> vector<8x128xf32>
    %227 = arith.select %26, %226, %21 : vector<8x128xi1>, vector<8x128xf32>
    %228 = arith.maximumf %221, %225 : vector<8x128xf32>
    %229 = arith.maximumf %228, %227 : vector<8x128xf32>
    %230 = arith.subf %221, %229 : vector<8x128xf32>
    %231 = math.exp %230 : vector<8x128xf32>
    %232 = arith.subf %225, %229 : vector<8x128xf32>
    %233 = math.exp %232 : vector<8x128xf32>
    %234 = arith.addf %231, %233 : vector<8x128xf32>
    %235 = arith.subf %227, %229 : vector<8x128xf32>
    %236 = math.exp %235 : vector<8x128xf32>
    %237 = arith.addf %234, %236 : vector<8x128xf32>
    %238 = math.log %237 : vector<8x128xf32>
    %239 = arith.addf %229, %238 : vector<8x128xf32>
    %240 = arith.addf %239, %223 : vector<8x128xf32>
    %c0_61 = arith.constant 0 : index
    %c12 = arith.constant 12 : index
    %c0_62 = arith.constant 0 : index
    %241 = vector.load %arg6[%c0_61, %c12, %c0_62] : memref<8x16x128xf32, #tpu.memory_space<vmem>>, vector<8x1x128xf32>
    %242 = vector.shape_cast %241 : vector<8x1x128xf32> to vector<8x128xf32>
    %c1_i32_63 = arith.constant 1 : i32
    %243 = tpu.dynamic_rotate %240 by %c1_i32_63 dim 1 : vector<8x128xf32>, i32 -> vector<8x128xf32>
    %244 = arith.select %23, %243, %21 : vector<8x128xi1>, vector<8x128xf32>
    %c2_i32_64 = arith.constant 2 : i32
    %245 = tpu.dynamic_rotate %240 by %c2_i32_64 dim 1 : vector<8x128xf32>, i32 -> vector<8x128xf32>
    %246 = arith.select %26, %245, %21 : vector<8x128xi1>, vector<8x128xf32>
    %247 = arith.maximumf %240, %244 : vector<8x128xf32>
    %248 = arith.maximumf %247, %246 : vector<8x128xf32>
    %249 = arith.subf %240, %248 : vector<8x128xf32>
    %250 = math.exp %249 : vector<8x128xf32>
    %251 = arith.subf %244, %248 : vector<8x128xf32>
    %252 = math.exp %251 : vector<8x128xf32>
    %253 = arith.addf %250, %252 : vector<8x128xf32>
    %254 = arith.subf %246, %248 : vector<8x128xf32>
    %255 = math.exp %254 : vector<8x128xf32>
    %256 = arith.addf %253, %255 : vector<8x128xf32>
    %257 = math.log %256 : vector<8x128xf32>
    %258 = arith.addf %248, %257 : vector<8x128xf32>
    %259 = arith.addf %258, %242 : vector<8x128xf32>
    %c0_65 = arith.constant 0 : index
    %c13 = arith.constant 13 : index
    %c0_66 = arith.constant 0 : index
    %260 = vector.load %arg6[%c0_65, %c13, %c0_66] : memref<8x16x128xf32, #tpu.memory_space<vmem>>, vector<8x1x128xf32>
    %261 = vector.shape_cast %260 : vector<8x1x128xf32> to vector<8x128xf32>
    %c1_i32_67 = arith.constant 1 : i32
    %262 = tpu.dynamic_rotate %259 by %c1_i32_67 dim 1 : vector<8x128xf32>, i32 -> vector<8x128xf32>
    %263 = arith.select %23, %262, %21 : vector<8x128xi1>, vector<8x128xf32>
    %c2_i32_68 = arith.constant 2 : i32
    %264 = tpu.dynamic_rotate %259 by %c2_i32_68 dim 1 : vector<8x128xf32>, i32 -> vector<8x128xf32>
    %265 = arith.select %26, %264, %21 : vector<8x128xi1>, vector<8x128xf32>
    %266 = arith.maximumf %259, %263 : vector<8x128xf32>
    %267 = arith.maximumf %266, %265 : vector<8x128xf32>
    %268 = arith.subf %259, %267 : vector<8x128xf32>
    %269 = math.exp %268 : vector<8x128xf32>
    %270 = arith.subf %263, %267 : vector<8x128xf32>
    %271 = math.exp %270 : vector<8x128xf32>
    %272 = arith.addf %269, %271 : vector<8x128xf32>
    %273 = arith.subf %265, %267 : vector<8x128xf32>
    %274 = math.exp %273 : vector<8x128xf32>
    %275 = arith.addf %272, %274 : vector<8x128xf32>
    %276 = math.log %275 : vector<8x128xf32>
    %277 = arith.addf %267, %276 : vector<8x128xf32>
    %278 = arith.addf %277, %261 : vector<8x128xf32>
    %c0_69 = arith.constant 0 : index
    %c14 = arith.constant 14 : index
    %c0_70 = arith.constant 0 : index
    %279 = vector.load %arg6[%c0_69, %c14, %c0_70] : memref<8x16x128xf32, #tpu.memory_space<vmem>>, vector<8x1x128xf32>
    %280 = vector.shape_cast %279 : vector<8x1x128xf32> to vector<8x128xf32>
    %c1_i32_71 = arith.constant 1 : i32
    %281 = tpu.dynamic_rotate %278 by %c1_i32_71 dim 1 : vector<8x128xf32>, i32 -> vector<8x128xf32>
    %282 = arith.select %23, %281, %21 : vector<8x128xi1>, vector<8x128xf32>
    %c2_i32_72 = arith.constant 2 : i32
    %283 = tpu.dynamic_rotate %278 by %c2_i32_72 dim 1 : vector<8x128xf32>, i32 -> vector<8x128xf32>
    %284 = arith.select %26, %283, %21 : vector<8x128xi1>, vector<8x128xf32>
    %285 = arith.maximumf %278, %282 : vector<8x128xf32>
    %286 = arith.maximumf %285, %284 : vector<8x128xf32>
    %287 = arith.subf %278, %286 : vector<8x128xf32>
    %288 = math.exp %287 : vector<8x128xf32>
    %289 = arith.subf %282, %286 : vector<8x128xf32>
    %290 = math.exp %289 : vector<8x128xf32>
    %291 = arith.addf %288, %290 : vector<8x128xf32>
    %292 = arith.subf %284, %286 : vector<8x128xf32>
    %293 = math.exp %292 : vector<8x128xf32>
    %294 = arith.addf %291, %293 : vector<8x128xf32>
    %295 = math.log %294 : vector<8x128xf32>
    %296 = arith.addf %286, %295 : vector<8x128xf32>
    %297 = arith.addf %296, %280 : vector<8x128xf32>
    %c0_73 = arith.constant 0 : index
    %c15 = arith.constant 15 : index
    %c0_74 = arith.constant 0 : index
    %298 = vector.load %arg6[%c0_73, %c15, %c0_74] : memref<8x16x128xf32, #tpu.memory_space<vmem>>, vector<8x1x128xf32>
    %299 = vector.shape_cast %298 : vector<8x1x128xf32> to vector<8x128xf32>
    %c1_i32_75 = arith.constant 1 : i32
    %300 = tpu.dynamic_rotate %297 by %c1_i32_75 dim 1 : vector<8x128xf32>, i32 -> vector<8x128xf32>
    %301 = arith.select %23, %300, %21 : vector<8x128xi1>, vector<8x128xf32>
    %c2_i32_76 = arith.constant 2 : i32
    %302 = tpu.dynamic_rotate %297 by %c2_i32_76 dim 1 : vector<8x128xf32>, i32 -> vector<8x128xf32>
    %303 = arith.select %26, %302, %21 : vector<8x128xi1>, vector<8x128xf32>
    %304 = arith.maximumf %297, %301 : vector<8x128xf32>
    %305 = arith.maximumf %304, %303 : vector<8x128xf32>
    %306 = arith.subf %297, %305 : vector<8x128xf32>
    %307 = math.exp %306 : vector<8x128xf32>
    %308 = arith.subf %301, %305 : vector<8x128xf32>
    %309 = math.exp %308 : vector<8x128xf32>
    %310 = arith.addf %307, %309 : vector<8x128xf32>
    %311 = arith.subf %303, %305 : vector<8x128xf32>
    %312 = math.exp %311 : vector<8x128xf32>
    %313 = arith.addf %310, %312 : vector<8x128xf32>
    %314 = math.log %313 : vector<8x128xf32>
    %315 = arith.addf %305, %314 : vector<8x128xf32>
    %316 = arith.addf %315, %299 : vector<8x128xf32>
    %c0_77 = arith.constant 0 : index
    %c0_78 = arith.constant 0 : index
    %317 = vector.load %arg4[%c0_77, %c0_78] : memref<8x128xf32, #tpu.memory_space<vmem>>, vector<8x128xf32>
    %cst_79 = arith.constant 5.000000e-01 : f32
    %318 = vector.broadcast %cst_79 : f32 to vector<8x128xf32>
    %319 = arith.cmpf ogt, %317, %318 : vector<8x128xf32>
    %320 = arith.select %319, %316, %21 : vector<8x128xi1>, vector<8x128xf32>
    %cst_80 = arith.constant dense<0xFF800000> : vector<8xf32>
    %321 = vector.multi_reduction <maximumf>, %320, %cst_80 [1] : vector<8x128xf32> to vector<8xf32>
    %322 = vector.shape_cast %321 : vector<8xf32> to vector<8x1xf32>
    %323 = vector.broadcast %322 : vector<8x1xf32> to vector<8x128xf32>
    %324 = arith.subf %320, %323 : vector<8x128xf32>
    %325 = math.exp %324 : vector<8x128xf32>
    %cst_81 = arith.constant dense<0.000000e+00> : vector<8xf32>
    %326 = vector.multi_reduction <add>, %325, %cst_81 [1] : vector<8x128xf32> to vector<8xf32>
    %327 = vector.shape_cast %326 : vector<8xf32> to vector<8x1xf32>
    %328 = math.log %327 : vector<8x1xf32>
    %329 = arith.addf %322, %328 : vector<8x1xf32>
    %cst_82 = arith.constant 0.000000e+00 : f32
    %330 = vector.broadcast %cst_82 : f32 to vector<8x1xf32>
    %331 = arith.subf %330, %329 : vector<8x1xf32>
    %332 = vector.shape_cast %331 : vector<8x1xf32> to vector<8x1xf32>
    %333 = vector.broadcast %332 : vector<8x1xf32> to vector<8x128xf32>
    %c0_83 = arith.constant 0 : index
    %c0_84 = arith.constant 0 : index
    %334 = vector.load %arg5[%c0_83, %c0_84] : memref<8x128xf32, #tpu.memory_space<vmem>>, vector<8x128xf32>
    tpu.vector_store %arg5[%c0_83, %c0_84], %333 {strides = array<i32>} : memref<8x128xf32, #tpu.memory_space<vmem>>, vector<8x128xf32>,
    return
  }
  func.func @transform_0(%arg0: i32) -> (i32, i32, i32) {
    %c0_i32 = arith.constant 0 : i32
    %c0_i32_0 = arith.constant 0 : i32
    %c0_i32_1 = arith.constant 0 : i32
    return %arg0, %c0_i32, %c0_i32_0 : i32, i32, i32
  }
  func.func @transform_1(%arg0: i32) -> (i32, i32, i32) {
    %c0_i32 = arith.constant 0 : i32
    %c0_i32_0 = arith.constant 0 : i32
    %c0_i32_1 = arith.constant 0 : i32
    return %arg0, %c0_i32, %c0_i32_0 : i32, i32, i32
  }
  func.func @transform_2(%arg0: i32) -> (i32, i32) {
    %c0_i32 = arith.constant 0 : i32
    %c0_i32_0 = arith.constant 0 : i32
    return %arg0, %c0_i32 : i32, i32
  }
  func.func @transform_3(%arg0: i32) -> (i32, i32) {
    %c0_i32 = arith.constant 0 : i32
    %c0_i32_0 = arith.constant 0 : i32
    return %arg0, %c0_i32 : i32, i32
  }
  func.func @transform_4(%arg0: i32) -> (i32, i32) {
    %c0_i32 = arith.constant 0 : i32
    %c0_i32_0 = arith.constant 0 : i32
    return %arg0, %c0_i32 : i32, i32
  }
}

</mosaic_0001>

<llo_original>
// kernel: tpu_custom_call.1
$region0: #{tpu_custom_call.1}
  #allocation0 [shape = 'u32[]', space=smem, size = 0x4, offset = 0x4, fixed_abs, tag = 'smem constant byte address 0x4 - core index']
  #allocation1 [shape = 'u32[144,128]{1,0:T(1,128)}', space=vmem, size = 0x12000, scoped, tag = 'internal scratch']
  #allocation2 [shape = 'f32[8,16,128]{2,1,0:T(8,128)}', space=vmem, size = 0x10000, scoped, tag = 'scratch operand']
  %s0 = inlined_call_operand.hbm [shape: f32[8,16,32], index: 0, kind: input, shape index: {}]
  %s1 = inlined_call_operand.hbm [shape: s32[8,1,128], index: 1, kind: input, shape index: {}]
  %s2 = inlined_call_operand.hbm [shape: f32[8,128], index: 2, kind: input, shape index: {}]
  %s3 = inlined_call_operand.hbm [shape: f32[8,128], index: 3, kind: input, shape index: {}]
  %s4 = inlined_call_operand.hbm [shape: f32[8,128], index: 4, kind: output, shape index: {}]
  %s5 = sld [smem:[#allocation0]]
  $region42: #{tpu_custom_call.1} parent=0
    _
  %s7 = ssub.s32 1, %s5
  %s8 = scalar_select 0, %s7, %s5
  $region1: #{tpu_custom_call.1} parent=0
    #allocation3 [shape = 'u8[65536]{0}', space=vmem, size = 0x10000, scoped, tag = 'input window, operand 0, single buffered']
    #allocation4 [shape = 's32[1]{0}', space=sflag, size = 0x4, scoped, tag = 'scoped memory for tpu_custom_call.1']
    #allocation5 [shape = 's32[1]{0}', space=sflag, size = 0x4, scoped, tag = 'scoped memory for tpu_custom_call.1']
    #allocation6 [shape = 'u8[4096]{0}', space=vmem, size = 0x1000, scoped, tag = 'input window, operand 1, single buffered']
    #allocation7 [shape = 's32[1]{0}', space=sflag, size = 0x4, scoped, tag = 'scoped memory for tpu_custom_call.1']
    #allocation8 [shape = 'u8[4096]{0}', space=vmem, size = 0x1000, scoped, tag = 'input window, operand 2, single buffered']
    #allocation9 [shape = 'u8[4096]{0}', space=vmem, size = 0x1000, scoped, tag = 'input window, operand 3, single buffered']
    #allocation10 [shape = 's32[1]{0}', space=sflag, size = 0x4, scoped, tag = 'scoped memory for tpu_custom_call.1']
    #allocation11 [shape = 'u8[4096]{0}', space=vmem, size = 0x1000, scoped, tag = 'output window, operand 0, single buffered']
    %9 = vsyncpa [#allocation4], 0
    %10 = vsyncpa [#allocation7], 0
    %11 = vsyncpa [#allocation10], 0
    %12 = vsyncpa [#allocation5], 0
    // Predicated region
    $region2: #{tpu_custom_call.1} parent=1 // pred_check
      _
    $region3: #{tpu_custom_call.1} parent=1 // pred_check_branch
      %14 = sbr.rel (0) target = $region5
    $region4: #{tpu_custom_call.1} parent=1 // pred_region
      %s16 = ssub.s32 2048, 2048
      %17 = vsyncadd [#allocation4], %s16
      %s18 = sshll.u32 [#allocation3], 4
      %s19 = int_to_ptr.vmem [resolvable:$true] %s18
      %24 = dma.hbm_to_vmem [thread:$0]  %s0, 2048, %s19, [#allocation4], 128, 128, 8
    $region5: #{tpu_custom_call.1} parent=1 // pred_fallthru
      _
    // Predicated region
    $region6: #{tpu_custom_call.1} parent=1 // pred_check
      _
    $region7: #{tpu_custom_call.1} parent=1 // pred_check_branch
      %26 = sbr.rel (0) target = $region9
    $region8: #{tpu_custom_call.1} parent=1 // pred_region
      %s28 = ssub.s32 128, 128
      %29 = vsyncadd [#allocation7], %s28
      %s30 = sshll.u32 [#allocation6], 4
      %s31 = int_to_ptr.vmem [resolvable:$true] %s30
      %36 = dma.hbm_to_vmem [thread:$0]  %s1, 128, %s31, [#allocation7], 16, 16, 1
    $region9: #{tpu_custom_call.1} parent=1 // pred_fallthru
      _
    // Predicated region
    $region10: #{tpu_custom_call.1} parent=1 // pred_check
      _
    $region11: #{tpu_custom_call.1} parent=1 // pred_check_branch
      %38 = sbr.rel (0) target = $region13
    $region12: #{tpu_custom_call.1} parent=1 // pred_region
      %s40 = ssub.s32 128, 128
      %41 = vsyncadd [#allocation7], %s40
      %s43 = sshll.u32 [#allocation8], 4
      %s44 = int_to_ptr.vmem [resolvable:$true] %s43
      %46 = dma.hbm_to_vmem [thread:$0]  %s2, 128, %s44, [#allocation7]
    $region13: #{tpu_custom_call.1} parent=1 // pred_fallthru
      _
    // Predicated region
    $region14: #{tpu_custom_call.1} parent=1 // pred_check
      _
    $region15: #{tpu_custom_call.1} parent=1 // pred_check_branch
      %48 = sbr.rel (0) target = $region17
    $region16: #{tpu_custom_call.1} parent=1 // pred_region
      %s50 = ssub.s32 128, 128
      %51 = vsyncadd [#allocation10], %s50
      %s53 = sshll.u32 [#allocation9], 4
      %s54 = int_to_ptr.vmem [resolvable:$true] %s53
      %56 = dma.hbm_to_vmem [thread:$0]  %s3, 128, %s54, [#allocation10]
    $region17: #{tpu_custom_call.1} parent=1 // pred_fallthru
      _
    // Predicated region
    $region18: #{tpu_custom_call.1} parent=1 // pred_check
      _
    $region19: #{tpu_custom_call.1} parent=1 // pred_check_branch
      %58 = sbr.rel (0) target = $region21
    $region20: #{tpu_custom_call.1} parent=1 // pred_region
      %59 = dma.done [#allocation4], 2048
    $region21: #{tpu_custom_call.1} parent=1 // pred_fallthru
      _
    // Predicated region
    $region22: #{tpu_custom_call.1} parent=1 // pred_check
      _
    $region23: #{tpu_custom_call.1} parent=1 // pred_check_branch
      %61 = sbr.rel (0) target = $region25
    $region24: #{tpu_custom_call.1} parent=1 // pred_region
      %62 = dma.done [#allocation7], 128
    $region25: #{tpu_custom_call.1} parent=1 // pred_fallthru
      _
    // Predicated region
    $region26: #{tpu_custom_call.1} parent=1 // pred_check
      _
    $region27: #{tpu_custom_call.1} parent=1 // pred_check_branch
      %64 = sbr.rel (0) target = $region29
    $region28: #{tpu_custom_call.1} parent=1 // pred_region
      %65 = dma.done [#allocation7], 128
    $region29: #{tpu_custom_call.1} parent=1 // pred_fallthru
      _
    // Predicated region
    $region30: #{tpu_custom_call.1} parent=1 // pred_check
      _
    $region31: #{tpu_custom_call.1} parent=1 // pred_check_branch
      %67 = sbr.rel (0) target = $region33
    $region32: #{tpu_custom_call.1} parent=1 // pred_region
      %68 = dma.done [#allocation10], 128
    $region33: #{tpu_custom_call.1} parent=1 // pred_fallthru
      _
    %v69 = vld [vmem:[#allocation3] sm:$0xff]
    %v70 = vld [vmem:[#allocation3 + $0x8] sm:$0xff]
    %v71 = vld [vmem:[#allocation3 + $0x10] sm:$0xff]
    %v72 = vld [vmem:[#allocation3 + $0x18] sm:$0xff]
    %v73 = vld [vmem:[#allocation3 + $0x20] sm:$0xff]
    %v74 = vld [vmem:[#allocation3 + $0x28] sm:$0xff]
    %v75 = vld [vmem:[#allocation3 + $0x30] sm:$0xff]
    %v76 = vld [vmem:[#allocation3 + $0x38] sm:$0xff]
    %v77 = vld [vmem:[#allocation3 + $0x40] sm:$0xff]
    %v78 = vld [vmem:[#allocation3 + $0x48] sm:$0xff]
    %v79 = vld [vmem:[#allocation3 + $0x50] sm:$0xff]
    %v80 = vld [vmem:[#allocation3 + $0x58] sm:$0xff]
    %v81 = vld [vmem:[#allocation3 + $0x60] sm:$0xff]
    %v82 = vld [vmem:[#allocation3 + $0x68] sm:$0xff]
    %v83 = vld [vmem:[#allocation3 + $0x70] sm:$0xff]
    %v84 = vld [vmem:[#allocation3 + $0x78] sm:$0xff]
    %vm85 = vcmask 261120
    %v86 = vsel %vm85, %v69, -inf
    %87 = vmax.xlane.f32.xlu0 %v86
    %v88 = vpop.xlane.xlu0 %87
    %v89 = vsel %vm85, %v70, -inf
    %90 = vmax.xlane.f32.xlu0 %v89
    %v91 = vpop.xlane.xlu0 %90
    %v92 = vsel %vm85, %v71, -inf
    %93 = vmax.xlane.f32.xlu0 %v92
    %v94 = vpop.xlane.xlu0 %93
    %v95 = vsel %vm85, %v72, -inf
    %96 = vmax.xlane.f32.xlu0 %v95
    %v97 = vpop.xlane.xlu0 %96
    %v98 = vsel %vm85, %v73, -inf
    %99 = vmax.xlane.f32.xlu0 %v98
    %v100 = vpop.xlane.xlu0 %99
    %v101 = vsel %vm85, %v74, -inf
    %102 = vmax.xlane.f32.xlu0 %v101
    %v103 = vpop.xlane.xlu0 %102
    %v104 = vsel %vm85, %v75, -inf
    %105 = vmax.xlane.f32.xlu0 %v104
    %v106 = vpop.xlane.xlu0 %105
    %v107 = vsel %vm85, %v76, -inf
    %108 = vmax.xlane.f32.xlu0 %v107
    %v109 = vpop.xlane.xlu0 %108
    %v110 = vsel %vm85, %v77, -inf
    %111 = vmax.xlane.f32.xlu0 %v110
    %v112 = vpop.xlane.xlu0 %111
    %v113 = vsel %vm85, %v78, -inf
    %114 = vmax.xlane.f32.xlu0 %v113
    %v115 = vpop.xlane.xlu0 %114
    %v116 = vsel %vm85, %v79, -inf
    %117 = vmax.xlane.f32.xlu0 %v116
    %v118 = vpop.xlane.xlu0 %117
    %v119 = vsel %vm85, %v80, -inf
    %120 = vmax.xlane.f32.xlu0 %v119
    %v121 = vpop.xlane.xlu0 %120
    %v122 = vsel %vm85, %v81, -inf
    %123 = vmax.xlane.f32.xlu0 %v122
    %v124 = vpop.xlane.xlu0 %123
    %v125 = vsel %vm85, %v82, -inf
    %126 = vmax.xlane.f32.xlu0 %v125
    %v127 = vpop.xlane.xlu0 %126
    %v128 = vsel %vm85, %v83, -inf
    %129 = vmax.xlane.f32.xlu0 %v128
    %v130 = vpop.xlane.xlu0 %129
    %v131 = vsel %vm85, %v84, -inf
    %132 = vmax.xlane.f32.xlu0 %v131
    %v133 = vpop.xlane.xlu0 %132
    %v134 = vsub.f32 %v69, %v88
    %v135 = vsub.f32 %v70, %v91
    %v136 = vsub.f32 %v71, %v94
    %v137 = vsub.f32 %v72, %v97
    %v138 = vsub.f32 %v73, %v100
    %v139 = vsub.f32 %v74, %v103
    %v140 = vsub.f32 %v75, %v106
    %v141 = vsub.f32 %v76, %v109
    %v142 = vsub.f32 %v77, %v112
    %v143 = vsub.f32 %v78, %v115
    %v144 = vsub.f32 %v79, %v118
    %v145 = vsub.f32 %v80, %v121
    %v146 = vsub.f32 %v81, %v124
    %v147 = vsub.f32 %v82, %v127
    %v148 = vsub.f32 %v83, %v130
    %v149 = vsub.f32 %v84, %v133
    %v150 = vmul.f32 %v134, 1.442695
    %v151 = vpow.pop %v150
    %v152 = vmul.f32 %v135, 1.442695
    %v153 = vpow.pop %v152
    %v154 = vmul.f32 %v136, 1.442695
    %v155 = vpow.pop %v154
    %v156 = vmul.f32 %v137, 1.442695
    %v157 = vpow.pop %v156
    %v158 = vmul.f32 %v138, 1.442695
    %v159 = vpow.pop %v158
    %v160 = vmul.f32 %v139, 1.442695
    %v161 = vpow.pop %v160
    %v162 = vmul.f32 %v140, 1.442695
    %v163 = vpow.pop %v162
    %v164 = vmul.f32 %v141, 1.442695
    %v165 = vpow.pop %v164
    %v166 = vmul.f32 %v142, 1.442695
    %v167 = vpow.pop %v166
    %v168 = vmul.f32 %v143, 1.442695
    %v169 = vpow.pop %v168
    %v170 = vmul.f32 %v144, 1.442695
    %v171 = vpow.pop %v170
    %v172 = vmul.f32 %v145, 1.442695
    %v173 = vpow.pop %v172
    %v174 = vmul.f32 %v146, 1.442695
    %v175 = vpow.pop %v174
    %v176 = vmul.f32 %v147, 1.442695
    %v177 = vpow.pop %v176
    %v178 = vmul.f32 %v148, 1.442695
    %v179 = vpow.pop %v178
    %v180 = vmul.f32 %v149, 1.442695
    %v181 = vpow.pop %v180
    %v182 = vsel %vm85, %v151, 0.0
    %183 = vadd.xlane.f32.xlu0 %v182
    %v184 = vpop.xlane.xlu0 %183
    %v185 = vsel %vm85, %v153, 0.0
    %186 = vadd.xlane.f32.xlu0 %v185
    %v187 = vpop.xlane.xlu0 %186
    %v188 = vsel %vm85, %v155, 0.0
    %189 = vadd.xlane.f32.xlu0 %v188
    %v190 = vpop.xlane.xlu0 %189
    %v191 = vsel %vm85, %v157, 0.0
    %192 = vadd.xlane.f32.xlu0 %v191
    %v193 = vpop.xlane.xlu0 %192
    %v194 = vsel %vm85, %v159, 0.0
    %195 = vadd.xlane.f32.xlu0 %v194
    %v196 = vpop.xlane.xlu0 %195
    %v197 = vsel %vm85, %v161, 0.0
    %198 = vadd.xlane.f32.xlu0 %v197
    %v199 = vpop.xlane.xlu0 %198
    %v200 = vsel %vm85, %v163, 0.0
    %201 = vadd.xlane.f32.xlu0 %v200
    %v202 = vpop.xlane.xlu0 %201
    %v203 = vsel %vm85, %v165, 0.0
    %204 = vadd.xlane.f32.xlu0 %v203
    %v205 = vpop.xlane.xlu0 %204
    %v206 = vsel %vm85, %v167, 0.0
    %207 = vadd.xlane.f32.xlu0 %v206
    %v208 = vpop.xlane.xlu0 %207
    %v209 = vsel %vm85, %v169, 0.0
    %210 = vadd.xlane.f32.xlu0 %v209
    %v211 = vpop.xlane.xlu0 %210
    %v212 = vsel %vm85, %v171, 0.0
    %213 = vadd.xlane.f32.xlu0 %v212
    %v214 = vpop.xlane.xlu0 %213
    %v215 = vsel %vm85, %v173, 0.0
    %216 = vadd.xlane.f32.xlu0 %v215
    %v217 = vpop.xlane.xlu0 %216
    %v218 = vsel %vm85, %v175, 0.0
    %219 = vadd.xlane.f32.xlu0 %v218
    %v220 = vpop.xlane.xlu0 %219
    %v221 = vsel %vm85, %v177, 0.0
    %222 = vadd.xlane.f32.xlu0 %v221
    %v223 = vpop.xlane.xlu0 %222
    %v224 = vsel %vm85, %v179, 0.0
    %225 = vadd.xlane.f32.xlu0 %v224
    %v226 = vpop.xlane.xlu0 %225
    %v227 = vsel %vm85, %v181, 0.0
    %228 = vadd.xlane.f32.xlu0 %v227
    %v229 = vpop.xlane.xlu0 %228
    %v230 = vlog2.pop %v184
    %v231 = vmul.f32 %v230, 0.6931472
    %v232 = vlog2.pop %v187
    %v233 = vmul.f32 %v232, 0.6931472
    %v234 = vlog2.pop %v190
    %v235 = vmul.f32 %v234, 0.6931472
    %v236 = vlog2.pop %v193
    %v237 = vmul.f32 %v236, 0.6931472
    %v238 = vlog2.pop %v196
    %v239 = vmul.f32 %v238, 0.6931472
    %v240 = vlog2.pop %v199
    %v241 = vmul.f32 %v240, 0.6931472
    %v242 = vlog2.pop %v202
    %v243 = vmul.f32 %v242, 0.6931472
    %v244 = vlog2.pop %v205
    %v245 = vmul.f32 %v244, 0.6931472
    %v246 = vlog2.pop %v208
    %v247 = vmul.f32 %v246, 0.6931472
    %v248 = vlog2.pop %v211
    %v249 = vmul.f32 %v248, 0.6931472
    %v250 = vlog2.pop %v214
    %v251 = vmul.f32 %v250, 0.6931472
    %v252 = vlog2.pop %v217
    %v253 = vmul.f32 %v252, 0.6931472
    %v254 = vlog2.pop %v220
    %v255 = vmul.f32 %v254, 0.6931472
    %v256 = vlog2.pop %v223
    %v257 = vmul.f32 %v256, 0.6931472
    %v258 = vlog2.pop %v226
    %v259 = vmul.f32 %v258, 0.6931472
    %v260 = vlog2.pop %v229
    %v261 = vmul.f32 %v260, 0.6931472
    %v262 = vadd.f32 %v88, %v231
    %v263 = vadd.f32 %v91, %v233
    %v264 = vadd.f32 %v94, %v235
    %v265 = vadd.f32 %v97, %v237
    %v266 = vadd.f32 %v100, %v239
    %v267 = vadd.f32 %v103, %v241
    %v268 = vadd.f32 %v106, %v243
    %v269 = vadd.f32 %v109, %v245
    %v270 = vadd.f32 %v112, %v247
    %v271 = vadd.f32 %v115, %v249
    %v272 = vadd.f32 %v118, %v251
    %v273 = vadd.f32 %v121, %v253
    %v274 = vadd.f32 %v124, %v255
    %v275 = vadd.f32 %v127, %v257
    %v276 = vadd.f32 %v130, %v259
    %v277 = vadd.f32 %v133, %v261
    %v278 = vsub.f32 %v69, %v262
    %v279 = vsub.f32 %v70, %v263
    %v280 = vsub.f32 %v71, %v264
    %v281 = vsub.f32 %v72, %v265
    %v282 = vsub.f32 %v73, %v266
    %v283 = vsub.f32 %v74, %v267
    %v284 = vsub.f32 %v75, %v268
    %v285 = vsub.f32 %v76, %v269
    %v286 = vsub.f32 %v77, %v270
    %v287 = vsub.f32 %v78, %v271
    %v288 = vsub.f32 %v79, %v272
    %v289 = vsub.f32 %v80, %v273
    %v290 = vsub.f32 %v81, %v274
    %v291 = vsub.f32 %v82, %v275
    %v292 = vsub.f32 %v83, %v276
    %v293 = vsub.f32 %v84, %v277
    %v294 = vlaneseq
    %v295 = vshrl.u32 %v294, 7
    %v296 = vadd.s32 %v295, 8
    %v297 = vadd.s32 %v295, 16
    %v298 = vadd.s32 %v295, 24
    %v299 = vld [vmem:[#allocation6] sm:$0x1]
    %v300 = vld [vmem:[#allocation6 + $0x1] sm:$0x1]
    %v301 = vld [vmem:[#allocation6 + $0x2] sm:$0x1]
    %v302 = vld [vmem:[#allocation6 + $0x3] sm:$0x1]
    %v303 = vld [vmem:[#allocation6 + $0x4] sm:$0x1]
    %v304 = vld [vmem:[#allocation6 + $0x5] sm:$0x1]
    %v305 = vld [vmem:[#allocation6 + $0x6] sm:$0x1]
    %v306 = vld [vmem:[#allocation6 + $0x7] sm:$0x1]
    %v307 = vlaneseq
    %v308 = vshrl.u32 %v307, 7
    %v309 = vsub.s32 0, %v308
    %v310 = vrot.slane %v299, %v309
    %v311 = vlaneseq
    %v312 = vshrl.u32 %v311, 7
    %v313 = vsub.s32 0, %v312
    %v314 = vrot.slane %v300, %v313
    %v315 = vlaneseq
    %v316 = vshrl.u32 %v315, 7
    %v317 = vsub.s32 0, %v316
    %v318 = vrot.slane %v301, %v317
    %v319 = vlaneseq
    %v320 = vshrl.u32 %v319, 7
    %v321 = vsub.s32 0, %v320
    %v322 = vrot.slane %v302, %v321
    %v323 = vlaneseq
    %v324 = vshrl.u32 %v323, 7
    %v325 = vsub.s32 0, %v324
    %v326 = vrot.slane %v303, %v325
    %v327 = vlaneseq
    %v328 = vshrl.u32 %v327, 7
    %v329 = vsub.s32 0, %v328
    %v330 = vrot.slane %v304, %v329
    %v331 = vlaneseq
    %v332 = vshrl.u32 %v331, 7
    %v333 = vsub.s32 0, %v332
    %v334 = vrot.slane %v305, %v333
    %v335 = vlaneseq
    %v336 = vshrl.u32 %v335, 7
    %v337 = vsub.s32 0, %v336
    %v338 = vrot.slane %v306, %v337
    %vm339 = vcmp.eq.s32.totalorder %v295, %v310
    %vm340 = vcmp.eq.s32.totalorder %v296, %v310
    %vm341 = vcmp.eq.s32.totalorder %v297, %v310
    %vm342 = vcmp.eq.s32.totalorder %v298, %v310
    %vm343 = vcmp.eq.s32.totalorder %v295, %v314
    %vm344 = vcmp.eq.s32.totalorder %v296, %v314
    %vm345 = vcmp.eq.s32.totalorder %v297, %v314
    %vm346 = vcmp.eq.s32.totalorder %v298, %v314
    %vm347 = vcmp.eq.s32.totalorder %v295, %v318
    %vm348 = vcmp.eq.s32.totalorder %v296, %v318
    %vm349 = vcmp.eq.s32.totalorder %v297, %v318
    %vm350 = vcmp.eq.s32.totalorder %v298, %v318
    %vm351 = vcmp.eq.s32.totalorder %v295, %v322
    %vm352 = vcmp.eq.s32.totalorder %v296, %v322
    %vm353 = vcmp.eq.s32.totalorder %v297, %v322
    %vm354 = vcmp.eq.s32.totalorder %v298, %v322
    %vm355 = vcmp.eq.s32.totalorder %v295, %v326
    %vm356 = vcmp.eq.s32.totalorder %v296, %v326
    %vm357 = vcmp.eq.s32.totalorder %v297, %v326
    %vm358 = vcmp.eq.s32.totalorder %v298, %v326
    %vm359 = vcmp.eq.s32.totalorder %v295, %v330
    %vm360 = vcmp.eq.s32.totalorder %v296, %v330
    %vm361 = vcmp.eq.s32.totalorder %v297, %v330
    %vm362 = vcmp.eq.s32.totalorder %v298, %v330
    %vm363 = vcmp.eq.s32.totalorder %v295, %v334
    %vm364 = vcmp.eq.s32.totalorder %v296, %v334
    %vm365 = vcmp.eq.s32.totalorder %v297, %v334
    %vm366 = vcmp.eq.s32.totalorder %v298, %v334
    %vm367 = vcmp.eq.s32.totalorder %v295, %v338
    %vm368 = vcmp.eq.s32.totalorder %v296, %v338
    %vm369 = vcmp.eq.s32.totalorder %v297, %v338
    %vm370 = vcmp.eq.s32.totalorder %v298, %v338
    %v371 = vsel %vm339, 1, 0
    %v372 = vsel %vm340, 1, 0
    %v373 = vsel %vm341, 1, 0
    %v374 = vsel %vm342, 1, 0
    %v375 = vsel %vm343, 1, 0
    %v376 = vsel %vm344, 1, 0
    %v377 = vsel %vm345, 1, 0
    %v378 = vsel %vm346, 1, 0
    %v379 = vsel %vm347, 1, 0
    %v380 = vsel %vm348, 1, 0
    %v381 = vsel %vm349, 1, 0
    %v382 = vsel %vm350, 1, 0
    %v383 = vsel %vm351, 1, 0
    %v384 = vsel %vm352, 1, 0
    %v385 = vsel %vm353, 1, 0
    %v386 = vsel %vm354, 1, 0
    %v387 = vsel %vm355, 1, 0
    %v388 = vsel %vm356, 1, 0
    %v389 = vsel %vm357, 1, 0
    %v390 = vsel %vm358, 1, 0
    %v391 = vsel %vm359, 1, 0
    %v392 = vsel %vm360, 1, 0
    %v393 = vsel %vm361, 1, 0
    %v394 = vsel %vm362, 1, 0
    %v395 = vsel %vm363, 1, 0
    %v396 = vsel %vm364, 1, 0
    %v397 = vsel %vm365, 1, 0
    %v398 = vsel %vm366, 1, 0
    %v399 = vsel %vm367, 1, 0
    %v400 = vsel %vm368, 1, 0
    %v401 = vsel %vm369, 1, 0
    %v402 = vsel %vm370, 1, 0
    %v403 = vcvt.s32.f32 %v371
    %v404 = vcvt.s32.f32 %v372
    %v405 = vcvt.s32.f32 %v373
    %v406 = vcvt.s32.f32 %v374
    %v407 = vcvt.s32.f32 %v375
    %v408 = vcvt.s32.f32 %v376
    %v409 = vcvt.s32.f32 %v377
    %v410 = vcvt.s32.f32 %v378
    %v411 = vcvt.s32.f32 %v379
    %v412 = vcvt.s32.f32 %v380
    %v413 = vcvt.s32.f32 %v381
    %v414 = vcvt.s32.f32 %v382
    %v415 = vcvt.s32.f32 %v383
    %v416 = vcvt.s32.f32 %v384
    %v417 = vcvt.s32.f32 %v385
    %v418 = vcvt.s32.f32 %v386
    %v419 = vcvt.s32.f32 %v387
    %v420 = vcvt.s32.f32 %v388
    %v421 = vcvt.s32.f32 %v389
    %v422 = vcvt.s32.f32 %v390
    %v423 = vcvt.s32.f32 %v391
    %v424 = vcvt.s32.f32 %v392
    %v425 = vcvt.s32.f32 %v393
    %v426 = vcvt.s32.f32 %v394
    %v427 = vcvt.s32.f32 %v395
    %v428 = vcvt.s32.f32 %v396
    %v429 = vcvt.s32.f32 %v397
    %v430 = vcvt.s32.f32 %v398
    %v431 = vcvt.s32.f32 %v399
    %v432 = vcvt.s32.f32 %v400
    %v433 = vcvt.s32.f32 %v401
    %v434 = vcvt.s32.f32 %v402
    %v436 = vsel %vm85, %v278, 0
    %v439 = vsel %vm85, %v279, 0
    %441 = vmatprep.subr.mxu0 0.0
    %442 = vmatpush1.msra.mxu0 0.0
    %443 = vmatprep.subr.mxu0 0.0
    %444 = vmatpush1.msra.mxu0 0.0
    %445 = vmatprep.subr.mxu0 0.0
    %446 = vmatpush1.msra.mxu0 0.0
    %447 = vmatprep.subr.mxu0 0.0
    %448 = vmatpush1.msra.mxu0 0.0
    %449 = vmatprep.subr.mxu0 0.0
    %450 = vmatpush1.msra.mxu0 0.0
    %451 = vmatprep.subr.mxu0 0.0
    %452 = vmatpush1.msra.mxu0 0.0
    %453 = vmatprep.subr.mxu0 0.0
    %454 = vmatpush1.msra.mxu0 0.0
    %455 = vmatprep.subr.mxu0 0.0
    %456 = vmatpush1.msra.mxu0 0.0
    %457 = vmatprep.subr.mxu0 0.0
    %458 = vmatpush1.msra.mxu0 0.0
    %459 = vmatprep.subr.mxu0 0.0
    %460 = vmatpush1.msra.mxu0 0.0
    %461 = vmatprep.subr.mxu0 0.0
    %462 = vmatpush1.msra.mxu0 0.0
    %463 = vmatprep.subr.mxu0 0.0
    %464 = vmatpush1.msra.mxu0 0.0
    %465 = vmatprep.subr.mxu0 0.0
    %466 = vmatpush1.msra.mxu0 %v406
    %467 = vmatprep.subr.mxu0 0.0
    %468 = vmatpush1.msra.mxu0 %v405
    %469 = vmatprep.subr.mxu0 0.0
    %470 = vmatpush1.msra.mxu0 %v404
    %471 = vmatprep.subr.mxu0 0.0
    %472 = vmatpush1.msra.mxu0 %v403
    %473 = vmatprep.subr.mxu0 0.0
    %474 = vmatpush2.msra.mxu0 0.0
    %475 = vmatprep.subr.mxu0 0.0
    %476 = vmatpush2.msra.mxu0 0.0
    %477 = vmatprep.subr.mxu0 0.0
    %478 = vmatpush2.msra.mxu0 0.0
    %479 = vmatprep.subr.mxu0 0.0
    %480 = vmatpush2.msra.mxu0 0.0
    %481 = vmatprep.subr.mxu0 0.0
    %482 = vmatpush2.msra.mxu0 0.0
    %483 = vmatprep.subr.mxu0 0.0
    %484 = vmatpush2.msra.mxu0 0.0
    %485 = vmatprep.subr.mxu0 0.0
    %486 = vmatpush2.msra.mxu0 0.0
    %487 = vmatprep.subr.mxu0 0.0
    %488 = vmatpush2.msra.mxu0 0.0
    %489 = vmatprep.subr.mxu0 0.0
    %490 = vmatpush2.msra.mxu0 0.0
    %491 = vmatprep.subr.mxu0 0.0
    %492 = vmatpush2.msra.mxu0 0.0
    %493 = vmatprep.subr.mxu0 0.0
    %494 = vmatpush2.msra.mxu0 0.0
    %495 = vmatprep.subr.mxu0 0.0
    %496 = vmatpush2.msra.mxu0 0.0
    %497 = vmatprep.subr.mxu0 0.0
    %498 = vmatpush2.msra.mxu0 0.0
    %499 = vmatprep.subr.mxu0 0.0
    %500 = vmatpush2.msra.mxu0 0.0
    %501 = vmatprep.subr.mxu0 0.0
    %502 = vmatpush2.msra.mxu0 0.0
    %503 = vmatprep.subr.mxu0 0.0
    %504 = vmatpush2.msra.mxu0 0.0
    %505 = vmatprep.mubr.f32.mxu0 0.0
    %506 = vmatmul.mubr.f32.gmra.mxu0 %v436
    %v507 = vpop.f32.mrf.mxu0
    %v508 = vadd.f32 0.0, %v507
    %v509 = vpop.f32.mrf.mxu0
    %510 = vmatprep.mubr.f32.mxu0 0.0
    %511 = vmatmul.mubr.f32.gmra.mxu0 %v439
    %v512 = vpop.f32.mrf.mxu0
    %v513 = vadd.f32 0.0, %v512
    %v514 = vpop.f32.mrf.mxu0
    %515 = vdwg.mxu0
    %v517 = vsel %vm85, %v280, 0
    %v520 = vsel %vm85, %v281, 0
    %522 = vmatprep.subr.mxu0 0.0
    %523 = vmatpush1.msra.mxu0 0.0
    %524 = vmatprep.subr.mxu0 0.0
    %525 = vmatpush1.msra.mxu0 0.0
    %526 = vmatprep.subr.mxu0 0.0
    %527 = vmatpush1.msra.mxu0 0.0
    %528 = vmatprep.subr.mxu0 0.0
    %529 = vmatpush1.msra.mxu0 0.0
    %530 = vmatprep.subr.mxu0 0.0
    %531 = vmatpush1.msra.mxu0 0.0
    %532 = vmatprep.subr.mxu0 0.0
    %533 = vmatpush1.msra.mxu0 0.0
    %534 = vmatprep.subr.mxu0 0.0
    %535 = vmatpush1.msra.mxu0 0.0
    %536 = vmatprep.subr.mxu0 0.0
    %537 = vmatpush1.msra.mxu0 0.0
    %538 = vmatprep.subr.mxu0 0.0
    %539 = vmatpush1.msra.mxu0 0.0
    %540 = vmatprep.subr.mxu0 0.0
    %541 = vmatpush1.msra.mxu0 0.0
    %542 = vmatprep.subr.mxu0 0.0
    %543 = vmatpush1.msra.mxu0 0.0
    %544 = vmatprep.subr.mxu0 0.0
    %545 = vmatpush1.msra.mxu0 0.0
    %546 = vmatprep.subr.mxu0 0.0
    %547 = vmatpush1.msra.mxu0 %v410
    %548 = vmatprep.subr.mxu0 0.0
    %549 = vmatpush1.msra.mxu0 %v409
    %550 = vmatprep.subr.mxu0 0.0
    %551 = vmatpush1.msra.mxu0 %v408
    %552 = vmatprep.subr.mxu0 0.0
    %553 = vmatpush1.msra.mxu0 %v407
    %554 = vmatprep.subr.mxu0 0.0
    %555 = vmatpush2.msra.mxu0 0.0
    %556 = vmatprep.subr.mxu0 0.0
    %557 = vmatpush2.msra.mxu0 0.0
    %558 = vmatprep.subr.mxu0 0.0
    %559 = vmatpush2.msra.mxu0 0.0
    %560 = vmatprep.subr.mxu0 0.0
    %561 = vmatpush2.msra.mxu0 0.0
    %562 = vmatprep.subr.mxu0 0.0
    %563 = vmatpush2.msra.mxu0 0.0
    %564 = vmatprep.subr.mxu0 0.0
    %565 = vmatpush2.msra.mxu0 0.0
    %566 = vmatprep.subr.mxu0 0.0
    %567 = vmatpush2.msra.mxu0 0.0
    %568 = vmatprep.subr.mxu0 0.0
    %569 = vmatpush2.msra.mxu0 0.0
    %570 = vmatprep.subr.mxu0 0.0
    %571 = vmatpush2.msra.mxu0 0.0
    %572 = vmatprep.subr.mxu0 0.0
    %573 = vmatpush2.msra.mxu0 0.0
    %574 = vmatprep.subr.mxu0 0.0
    %575 = vmatpush2.msra.mxu0 0.0
    %576 = vmatprep.subr.mxu0 0.0
    %577 = vmatpush2.msra.mxu0 0.0
    %578 = vmatprep.subr.mxu0 0.0
    %579 = vmatpush2.msra.mxu0 0.0
    %580 = vmatprep.subr.mxu0 0.0
    %581 = vmatpush2.msra.mxu0 0.0
    %582 = vmatprep.subr.mxu0 0.0
    %583 = vmatpush2.msra.mxu0 0.0
    %584 = vmatprep.subr.mxu0 0.0
    %585 = vmatpush2.msra.mxu0 0.0
    %586 = vmatprep.mubr.f32.mxu0 0.0
    %587 = vmatmul.mubr.f32.gmra.mxu0 %v517
    %v588 = vpop.f32.mrf.mxu0
    %v589 = vadd.f32 0.0, %v588
    %v590 = vpop.f32.mrf.mxu0
    %591 = vmatprep.mubr.f32.mxu0 0.0
    %592 = vmatmul.mubr.f32.gmra.mxu0 %v520
    %v593 = vpop.f32.mrf.mxu0
    %v594 = vadd.f32 0.0, %v593
    %v595 = vpop.f32.mrf.mxu0
    %596 = vdwg.mxu0
    %v598 = vsel %vm85, %v282, 0
    %v601 = vsel %vm85, %v283, 0
    %603 = vmatprep.subr.mxu0 0.0
    %604 = vmatpush1.msra.mxu0 0.0
    %605 = vmatprep.subr.mxu0 0.0
    %606 = vmatpush1.msra.mxu0 0.0
    %607 = vmatprep.subr.mxu0 0.0
    %608 = vmatpush1.msra.mxu0 0.0
    %609 = vmatprep.subr.mxu0 0.0
    %610 = vmatpush1.msra.mxu0 0.0
    %611 = vmatprep.subr.mxu0 0.0
    %612 = vmatpush1.msra.mxu0 0.0
    %613 = vmatprep.subr.mxu0 0.0
    %614 = vmatpush1.msra.mxu0 0.0
    %615 = vmatprep.subr.mxu0 0.0
    %616 = vmatpush1.msra.mxu0 0.0
    %617 = vmatprep.subr.mxu0 0.0
    %618 = vmatpush1.msra.mxu0 0.0
    %619 = vmatprep.subr.mxu0 0.0
    %620 = vmatpush1.msra.mxu0 0.0
    %621 = vmatprep.subr.mxu0 0.0
    %622 = vmatpush1.msra.mxu0 0.0
    %623 = vmatprep.subr.mxu0 0.0
    %624 = vmatpush1.msra.mxu0 0.0
    %625 = vmatprep.subr.mxu0 0.0
    %626 = vmatpush1.msra.mxu0 0.0
    %627 = vmatprep.subr.mxu0 0.0
    %628 = vmatpush1.msra.mxu0 %v414
    %629 = vmatprep.subr.mxu0 0.0
    %630 = vmatpush1.msra.mxu0 %v413
    %631 = vmatprep.subr.mxu0 0.0
    %632 = vmatpush1.msra.mxu0 %v412
    %633 = vmatprep.subr.mxu0 0.0
    %634 = vmatpush1.msra.mxu0 %v411
    %635 = vmatprep.subr.mxu0 0.0
    %636 = vmatpush2.msra.mxu0 0.0
    %637 = vmatprep.subr.mxu0 0.0
    %638 = vmatpush2.msra.mxu0 0.0
    %639 = vmatprep.subr.mxu0 0.0
    %640 = vmatpush2.msra.mxu0 0.0
    %641 = vmatprep.subr.mxu0 0.0
    %642 = vmatpush2.msra.mxu0 0.0
    %643 = vmatprep.subr.mxu0 0.0
    %644 = vmatpush2.msra.mxu0 0.0
    %645 = vmatprep.subr.mxu0 0.0
    %646 = vmatpush2.msra.mxu0 0.0
    %647 = vmatprep.subr.mxu0 0.0
    %648 = vmatpush2.msra.mxu0 0.0
    %649 = vmatprep.subr.mxu0 0.0
    %650 = vmatpush2.msra.mxu0 0.0
    %651 = vmatprep.subr.mxu0 0.0
    %652 = vmatpush2.msra.mxu0 0.0
    %653 = vmatprep.subr.mxu0 0.0
    %654 = vmatpush2.msra.mxu0 0.0
    %655 = vmatprep.subr.mxu0 0.0
    %656 = vmatpush2.msra.mxu0 0.0
    %657 = vmatprep.subr.mxu0 0.0
    %658 = vmatpush2.msra.mxu0 0.0
    %659 = vmatprep.subr.mxu0 0.0
    %660 = vmatpush2.msra.mxu0 0.0
    %661 = vmatprep.subr.mxu0 0.0
    %662 = vmatpush2.msra.mxu0 0.0
    %663 = vmatprep.subr.mxu0 0.0
    %664 = vmatpush2.msra.mxu0 0.0
    %665 = vmatprep.subr.mxu0 0.0
    %666 = vmatpush2.msra.mxu0 0.0
    %667 = vmatprep.mubr.f32.mxu0 0.0
    %668 = vmatmul.mubr.f32.gmra.mxu0 %v598
    %v669 = vpop.f32.mrf.mxu0
    %v670 = vadd.f32 0.0, %v669
    %v671 = vpop.f32.mrf.mxu0
    %672 = vmatprep.mubr.f32.mxu0 0.0
    %673 = vmatmul.mubr.f32.gmra.mxu0 %v601
    %v674 = vpop.f32.mrf.mxu0
    %v675 = vadd.f32 0.0, %v674
    %v676 = vpop.f32.mrf.mxu0
    %677 = vdwg.mxu0
    %v679 = vsel %vm85, %v284, 0
    %v682 = vsel %vm85, %v285, 0
    %684 = vmatprep.subr.mxu0 0.0
    %685 = vmatpush1.msra.mxu0 0.0
    %686 = vmatprep.subr.mxu0 0.0
    %687 = vmatpush1.msra.mxu0 0.0
    %688 = vmatprep.subr.mxu0 0.0
    %689 = vmatpush1.msra.mxu0 0.0
    %690 = vmatprep.subr.mxu0 0.0
    %691 = vmatpush1.msra.mxu0 0.0
    %692 = vmatprep.subr.mxu0 0.0
    %693 = vmatpush1.msra.mxu0 0.0
    %694 = vmatprep.subr.mxu0 0.0
    %695 = vmatpush1.msra.mxu0 0.0
    %696 = vmatprep.subr.mxu0 0.0
    %697 = vmatpush1.msra.mxu0 0.0
    %698 = vmatprep.subr.mxu0 0.0
    %699 = vmatpush1.msra.mxu0 0.0
    %700 = vmatprep.subr.mxu0 0.0
    %701 = vmatpush1.msra.mxu0 0.0
    %702 = vmatprep.subr.mxu0 0.0
    %703 = vmatpush1.msra.mxu0 0.0
    %704 = vmatprep.subr.mxu0 0.0
    %705 = vmatpush1.msra.mxu0 0.0
    %706 = vmatprep.subr.mxu0 0.0
    %707 = vmatpush1.msra.mxu0 0.0
    %708 = vmatprep.subr.mxu0 0.0
    %709 = vmatpush1.msra.mxu0 %v418
    %710 = vmatprep.subr.mxu0 0.0
    %711 = vmatpush1.msra.mxu0 %v417
    %712 = vmatprep.subr.mxu0 0.0
    %713 = vmatpush1.msra.mxu0 %v416
    %714 = vmatprep.subr.mxu0 0.0
    %715 = vmatpush1.msra.mxu0 %v415
    %716 = vmatprep.subr.mxu0 0.0
    %717 = vmatpush2.msra.mxu0 0.0
    %718 = vmatprep.subr.mxu0 0.0
    %719 = vmatpush2.msra.mxu0 0.0
    %720 = vmatprep.subr.mxu0 0.0
    %721 = vmatpush2.msra.mxu0 0.0
    %722 = vmatprep.subr.mxu0 0.0
    %723 = vmatpush2.msra.mxu0 0.0
    %724 = vmatprep.subr.mxu0 0.0
    %725 = vmatpush2.msra.mxu0 0.0
    %726 = vmatprep.subr.mxu0 0.0
    %727 = vmatpush2.msra.mxu0 0.0
    %728 = vmatprep.subr.mxu0 0.0
    %729 = vmatpush2.msra.mxu0 0.0
    %730 = vmatprep.subr.mxu0 0.0
    %731 = vmatpush2.msra.mxu0 0.0
    %732 = vmatprep.subr.mxu0 0.0
    %733 = vmatpush2.msra.mxu0 0.0
    %734 = vmatprep.subr.mxu0 0.0
    %735 = vmatpush2.msra.mxu0 0.0
    %736 = vmatprep.subr.mxu0 0.0
    %737 = vmatpush2.msra.mxu0 0.0
    %738 = vmatprep.subr.mxu0 0.0
    %739 = vmatpush2.msra.mxu0 0.0
    %740 = vmatprep.subr.mxu0 0.0
    %741 = vmatpush2.msra.mxu0 0.0
    %742 = vmatprep.subr.mxu0 0.0
    %743 = vmatpush2.msra.mxu0 0.0
    %744 = vmatprep.subr.mxu0 0.0
    %745 = vmatpush2.msra.mxu0 0.0
    %746 = vmatprep.subr.mxu0 0.0
    %747 = vmatpush2.msra.mxu0 0.0
    %748 = vmatprep.mubr.f32.mxu0 0.0
    %749 = vmatmul.mubr.f32.gmra.mxu0 %v679
    %v750 = vpop.f32.mrf.mxu0
    %v751 = vadd.f32 0.0, %v750
    %v752 = vpop.f32.mrf.mxu0
    %753 = vmatprep.mubr.f32.mxu0 0.0
    %754 = vmatmul.mubr.f32.gmra.mxu0 %v682
    %v755 = vpop.f32.mrf.mxu0
    %v756 = vadd.f32 0.0, %v755
    %v757 = vpop.f32.mrf.mxu0
    %758 = vdwg.mxu0
    %v760 = vsel %vm85, %v286, 0
    %v763 = vsel %vm85, %v287, 0
    %765 = vmatprep.subr.mxu0 0.0
    %766 = vmatpush1.msra.mxu0 0.0
    %767 = vmatprep.subr.mxu0 0.0
    %768 = vmatpush1.msra.mxu0 0.0
    %769 = vmatprep.subr.mxu0 0.0
    %770 = vmatpush1.msra.mxu0 0.0
    %771 = vmatprep.subr.mxu0 0.0
    %772 = vmatpush1.msra.mxu0 0.0
    %773 = vmatprep.subr.mxu0 0.0
    %774 = vmatpush1.msra.mxu0 0.0
    %775 = vmatprep.subr.mxu0 0.0
    %776 = vmatpush1.msra.mxu0 0.0
    %777 = vmatprep.subr.mxu0 0.0
    %778 = vmatpush1.msra.mxu0 0.0
    %779 = vmatprep.subr.mxu0 0.0
    %780 = vmatpush1.msra.mxu0 0.0
    %781 = vmatprep.subr.mxu0 0.0
    %782 = vmatpush1.msra.mxu0 0.0
    %783 = vmatprep.subr.mxu0 0.0
    %784 = vmatpush1.msra.mxu0 0.0
    %785 = vmatprep.subr.mxu0 0.0
    %786 = vmatpush1.msra.mxu0 0.0
    %787 = vmatprep.subr.mxu0 0.0
    %788 = vmatpush1.msra.mxu0 0.0
    %789 = vmatprep.subr.mxu0 0.0
    %790 = vmatpush1.msra.mxu0 %v422
    %791 = vmatprep.subr.mxu0 0.0
    %792 = vmatpush1.msra.mxu0 %v421
    %793 = vmatprep.subr.mxu0 0.0
    %794 = vmatpush1.msra.mxu0 %v420
    %795 = vmatprep.subr.mxu0 0.0
    %796 = vmatpush1.msra.mxu0 %v419
    %797 = vmatprep.subr.mxu0 0.0
    %798 = vmatpush2.msra.mxu0 0.0
    %799 = vmatprep.subr.mxu0 0.0
    %800 = vmatpush2.msra.mxu0 0.0
    %801 = vmatprep.subr.mxu0 0.0
    %802 = vmatpush2.msra.mxu0 0.0
    %803 = vmatprep.subr.mxu0 0.0
    %804 = vmatpush2.msra.mxu0 0.0
    %805 = vmatprep.subr.mxu0 0.0
    %806 = vmatpush2.msra.mxu0 0.0
    %807 = vmatprep.subr.mxu0 0.0
    %808 = vmatpush2.msra.mxu0 0.0
    %809 = vmatprep.subr.mxu0 0.0
    %810 = vmatpush2.msra.mxu0 0.0
    %811 = vmatprep.subr.mxu0 0.0
    %812 = vmatpush2.msra.mxu0 0.0
    %813 = vmatprep.subr.mxu0 0.0
    %814 = vmatpush2.msra.mxu0 0.0
    %815 = vmatprep.subr.mxu0 0.0
    %816 = vmatpush2.msra.mxu0 0.0
    %817 = vmatprep.subr.mxu0 0.0
    %818 = vmatpush2.msra.mxu0 0.0
    %819 = vmatprep.subr.mxu0 0.0
    %820 = vmatpush2.msra.mxu0 0.0
    %821 = vmatprep.subr.mxu0 0.0
    %822 = vmatpush2.msra.mxu0 0.0
    %823 = vmatprep.subr.mxu0 0.0
    %824 = vmatpush2.msra.mxu0 0.0
    %825 = vmatprep.subr.mxu0 0.0
    %826 = vmatpush2.msra.mxu0 0.0
    %827 = vmatprep.subr.mxu0 0.0
    %828 = vmatpush2.msra.mxu0 0.0
    %829 = vmatprep.mubr.f32.mxu0 0.0
    %830 = vmatmul.mubr.f32.gmra.mxu0 %v760
    %v831 = vpop.f32.mrf.mxu0
    %v832 = vadd.f32 0.0, %v831
    %v833 = vpop.f32.mrf.mxu0
    %834 = vmatprep.mubr.f32.mxu0 0.0
    %835 = vmatmul.mubr.f32.gmra.mxu0 %v763
    %v836 = vpop.f32.mrf.mxu0
    %v837 = vadd.f32 0.0, %v836
    %v838 = vpop.f32.mrf.mxu0
    %839 = vdwg.mxu0
    %v841 = vsel %vm85, %v288, 0
    %v844 = vsel %vm85, %v289, 0
    %846 = vmatprep.subr.mxu0 0.0
    %847 = vmatpush1.msra.mxu0 0.0
    %848 = vmatprep.subr.mxu0 0.0
    %849 = vmatpush1.msra.mxu0 0.0
    %850 = vmatprep.subr.mxu0 0.0
    %851 = vmatpush1.msra.mxu0 0.0
    %852 = vmatprep.subr.mxu0 0.0
    %853 = vmatpush1.msra.mxu0 0.0
    %854 = vmatprep.subr.mxu0 0.0
    %855 = vmatpush1.msra.mxu0 0.0
    %856 = vmatprep.subr.mxu0 0.0
    %857 = vmatpush1.msra.mxu0 0.0
    %858 = vmatprep.subr.mxu0 0.0
    %859 = vmatpush1.msra.mxu0 0.0
    %860 = vmatprep.subr.mxu0 0.0
    %861 = vmatpush1.msra.mxu0 0.0
    %862 = vmatprep.subr.mxu0 0.0
    %863 = vmatpush1.msra.mxu0 0.0
    %864 = vmatprep.subr.mxu0 0.0
    %865 = vmatpush1.msra.mxu0 0.0
    %866 = vmatprep.subr.mxu0 0.0
    %867 = vmatpush1.msra.mxu0 0.0
    %868 = vmatprep.subr.mxu0 0.0
    %869 = vmatpush1.msra.mxu0 0.0
    %870 = vmatprep.subr.mxu0 0.0
    %871 = vmatpush1.msra.mxu0 %v426
    %872 = vmatprep.subr.mxu0 0.0
    %873 = vmatpush1.msra.mxu0 %v425
    %874 = vmatprep.subr.mxu0 0.0
    %875 = vmatpush1.msra.mxu0 %v424
    %876 = vmatprep.subr.mxu0 0.0
    %877 = vmatpush1.msra.mxu0 %v423
    %878 = vmatprep.subr.mxu0 0.0
    %879 = vmatpush2.msra.mxu0 0.0
    %880 = vmatprep.subr.mxu0 0.0
    %881 = vmatpush2.msra.mxu0 0.0
    %882 = vmatprep.subr.mxu0 0.0
    %883 = vmatpush2.msra.mxu0 0.0
    %884 = vmatprep.subr.mxu0 0.0
    %885 = vmatpush2.msra.mxu0 0.0
    %886 = vmatprep.subr.mxu0 0.0
    %887 = vmatpush2.msra.mxu0 0.0
    %888 = vmatprep.subr.mxu0 0.0
    %889 = vmatpush2.msra.mxu0 0.0
    %890 = vmatprep.subr.mxu0 0.0
    %891 = vmatpush2.msra.mxu0 0.0
    %892 = vmatprep.subr.mxu0 0.0
    %893 = vmatpush2.msra.mxu0 0.0
    %894 = vmatprep.subr.mxu0 0.0
    %895 = vmatpush2.msra.mxu0 0.0
    %896 = vmatprep.subr.mxu0 0.0
    %897 = vmatpush2.msra.mxu0 0.0
    %898 = vmatprep.subr.mxu0 0.0
    %899 = vmatpush2.msra.mxu0 0.0
    %900 = vmatprep.subr.mxu0 0.0
    %901 = vmatpush2.msra.mxu0 0.0
    %902 = vmatprep.subr.mxu0 0.0
    %903 = vmatpush2.msra.mxu0 0.0
    %904 = vmatprep.subr.mxu0 0.0
    %905 = vmatpush2.msra.mxu0 0.0
    %906 = vmatprep.subr.mxu0 0.0
    %907 = vmatpush2.msra.mxu0 0.0
    %908 = vmatprep.subr.mxu0 0.0
    %909 = vmatpush2.msra.mxu0 0.0
    %910 = vmatprep.mubr.f32.mxu0 0.0
    %911 = vmatmul.mubr.f32.gmra.mxu0 %v841
    %v912 = vpop.f32.mrf.mxu0
    %v913 = vadd.f32 0.0, %v912
    %v914 = vpop.f32.mrf.mxu0
    %915 = vmatprep.mubr.f32.mxu0 0.0
    %916 = vmatmul.mubr.f32.gmra.mxu0 %v844
    %v917 = vpop.f32.mrf.mxu0
    %v918 = vadd.f32 0.0, %v917
    %v919 = vpop.f32.mrf.mxu0
    %920 = vdwg.mxu0
    %v922 = vsel %vm85, %v290, 0
    %v925 = vsel %vm85, %v291, 0
    %927 = vmatprep.subr.mxu0 0.0
    %928 = vmatpush1.msra.mxu0 0.0
    %929 = vmatprep.subr.mxu0 0.0
    %930 = vmatpush1.msra.mxu0 0.0
    %931 = vmatprep.subr.mxu0 0.0
    %932 = vmatpush1.msra.mxu0 0.0
    %933 = vmatprep.subr.mxu0 0.0
    %934 = vmatpush1.msra.mxu0 0.0
    %935 = vmatprep.subr.mxu0 0.0
    %936 = vmatpush1.msra.mxu0 0.0
    %937 = vmatprep.subr.mxu0 0.0
    %938 = vmatpush1.msra.mxu0 0.0
    %939 = vmatprep.subr.mxu0 0.0
    %940 = vmatpush1.msra.mxu0 0.0
    %941 = vmatprep.subr.mxu0 0.0
    %942 = vmatpush1.msra.mxu0 0.0
    %943 = vmatprep.subr.mxu0 0.0
    %944 = vmatpush1.msra.mxu0 0.0
    %945 = vmatprep.subr.mxu0 0.0
    %946 = vmatpush1.msra.mxu0 0.0
    %947 = vmatprep.subr.mxu0 0.0
    %948 = vmatpush1.msra.mxu0 0.0
    %949 = vmatprep.subr.mxu0 0.0
    %950 = vmatpush1.msra.mxu0 0.0
    %951 = vmatprep.subr.mxu0 0.0
    %952 = vmatpush1.msra.mxu0 %v430
    %953 = vmatprep.subr.mxu0 0.0
    %954 = vmatpush1.msra.mxu0 %v429
    %955 = vmatprep.subr.mxu0 0.0
    %956 = vmatpush1.msra.mxu0 %v428
    %957 = vmatprep.subr.mxu0 0.0
    %958 = vmatpush1.msra.mxu0 %v427
    %959 = vmatprep.subr.mxu0 0.0
    %960 = vmatpush2.msra.mxu0 0.0
    %961 = vmatprep.subr.mxu0 0.0
    %962 = vmatpush2.msra.mxu0 0.0
    %963 = vmatprep.subr.mxu0 0.0
    %964 = vmatpush2.msra.mxu0 0.0
    %965 = vmatprep.subr.mxu0 0.0
    %966 = vmatpush2.msra.mxu0 0.0
    %967 = vmatprep.subr.mxu0 0.0
    %968 = vmatpush2.msra.mxu0 0.0
    %969 = vmatprep.subr.mxu0 0.0
    %970 = vmatpush2.msra.mxu0 0.0
    %971 = vmatprep.subr.mxu0 0.0
    %972 = vmatpush2.msra.mxu0 0.0
    %973 = vmatprep.subr.mxu0 0.0
    %974 = vmatpush2.msra.mxu0 0.0
    %975 = vmatprep.subr.mxu0 0.0
    %976 = vmatpush2.msra.mxu0 0.0
    %977 = vmatprep.subr.mxu0 0.0
    %978 = vmatpush2.msra.mxu0 0.0
    %979 = vmatprep.subr.mxu0 0.0
    %980 = vmatpush2.msra.mxu0 0.0
    %981 = vmatprep.subr.mxu0 0.0
    %982 = vmatpush2.msra.mxu0 0.0
    %983 = vmatprep.subr.mxu0 0.0
    %984 = vmatpush2.msra.mxu0 0.0
    %985 = vmatprep.subr.mxu0 0.0
    %986 = vmatpush2.msra.mxu0 0.0
    %987 = vmatprep.subr.mxu0 0.0
    %988 = vmatpush2.msra.mxu0 0.0
    %989 = vmatprep.subr.mxu0 0.0
    %990 = vmatpush2.msra.mxu0 0.0
    %991 = vmatprep.mubr.f32.mxu0 0.0
    %992 = vmatmul.mubr.f32.gmra.mxu0 %v922
    %v993 = vpop.f32.mrf.mxu0
    %v994 = vadd.f32 0.0, %v993
    %v995 = vpop.f32.mrf.mxu0
    %996 = vmatprep.mubr.f32.mxu0 0.0
    %997 = vmatmul.mubr.f32.gmra.mxu0 %v925
    %v998 = vpop.f32.mrf.mxu0
    %v999 = vadd.f32 0.0, %v998
    %v1000 = vpop.f32.mrf.mxu0
    %1001 = vdwg.mxu0
    %v1003 = vsel %vm85, %v292, 0
    %v1006 = vsel %vm85, %v293, 0
    %1008 = vmatprep.subr.mxu0 0.0
    %1009 = vmatpush1.msra.mxu0 0.0
    %1010 = vmatprep.subr.mxu0 0.0
    %1011 = vmatpush1.msra.mxu0 0.0
    %1012 = vmatprep.subr.mxu0 0.0
    %1013 = vmatpush1.msra.mxu0 0.0
    %1014 = vmatprep.subr.mxu0 0.0
    %1015 = vmatpush1.msra.mxu0 0.0
    %1016 = vmatprep.subr.mxu0 0.0
    %1017 = vmatpush1.msra.mxu0 0.0
    %1018 = vmatprep.subr.mxu0 0.0
    %1019 = vmatpush1.msra.mxu0 0.0
    %1020 = vmatprep.subr.mxu0 0.0
    %1021 = vmatpush1.msra.mxu0 0.0
    %1022 = vmatprep.subr.mxu0 0.0
    %1023 = vmatpush1.msra.mxu0 0.0
    %1024 = vmatprep.subr.mxu0 0.0
    %1025 = vmatpush1.msra.mxu0 0.0
    %1026 = vmatprep.subr.mxu0 0.0
    %1027 = vmatpush1.msra.mxu0 0.0
    %1028 = vmatprep.subr.mxu0 0.0
    %1029 = vmatpush1.msra.mxu0 0.0
    %1030 = vmatprep.subr.mxu0 0.0
    %1031 = vmatpush1.msra.mxu0 0.0
    %1032 = vmatprep.subr.mxu0 0.0
    %1033 = vmatpush1.msra.mxu0 %v434
    %1034 = vmatprep.subr.mxu0 0.0
    %1035 = vmatpush1.msra.mxu0 %v433
    %1036 = vmatprep.subr.mxu0 0.0
    %1037 = vmatpush1.msra.mxu0 %v432
    %1038 = vmatprep.subr.mxu0 0.0
    %1039 = vmatpush1.msra.mxu0 %v431
    %1040 = vmatprep.subr.mxu0 0.0
    %1041 = vmatpush2.msra.mxu0 0.0
    %1042 = vmatprep.subr.mxu0 0.0
    %1043 = vmatpush2.msra.mxu0 0.0
    %1044 = vmatprep.subr.mxu0 0.0
    %1045 = vmatpush2.msra.mxu0 0.0
    %1046 = vmatprep.subr.mxu0 0.0
    %1047 = vmatpush2.msra.mxu0 0.0
    %1048 = vmatprep.subr.mxu0 0.0
    %1049 = vmatpush2.msra.mxu0 0.0
    %1050 = vmatprep.subr.mxu0 0.0
    %1051 = vmatpush2.msra.mxu0 0.0
    %1052 = vmatprep.subr.mxu0 0.0
    %1053 = vmatpush2.msra.mxu0 0.0
    %1054 = vmatprep.subr.mxu0 0.0
    %1055 = vmatpush2.msra.mxu0 0.0
    %1056 = vmatprep.subr.mxu0 0.0
    %1057 = vmatpush2.msra.mxu0 0.0
    %1058 = vmatprep.subr.mxu0 0.0
    %1059 = vmatpush2.msra.mxu0 0.0
    %1060 = vmatprep.subr.mxu0 0.0
    %1061 = vmatpush2.msra.mxu0 0.0
    %1062 = vmatprep.subr.mxu0 0.0
    %1063 = vmatpush2.msra.mxu0 0.0
    %1064 = vmatprep.subr.mxu0 0.0
    %1065 = vmatpush2.msra.mxu0 0.0
    %1066 = vmatprep.subr.mxu0 0.0
    %1067 = vmatpush2.msra.mxu0 0.0
    %1068 = vmatprep.subr.mxu0 0.0
    %1069 = vmatpush2.msra.mxu0 0.0
    %1070 = vmatprep.subr.mxu0 0.0
    %1071 = vmatpush2.msra.mxu0 0.0
    %1072 = vmatprep.mubr.f32.mxu0 0.0
    %1073 = vmatmul.mubr.f32.gmra.mxu0 %v1003
    %v1074 = vpop.f32.mrf.mxu0
    %v1075 = vadd.f32 0.0, %v1074
    %v1076 = vpop.f32.mrf.mxu0
    %1077 = vmatprep.mubr.f32.mxu0 0.0
    %1078 = vmatmul.mubr.f32.gmra.mxu0 %v1006
    %v1079 = vpop.f32.mrf.mxu0
    %v1080 = vadd.f32 0.0, %v1079
    %v1081 = vpop.f32.mrf.mxu0
    %1082 = vdwg.mxu0
    %1083 = vst [vmem:[#allocation2] sm:$0xff] %v508
    %1084 = vst [vmem:[#allocation2 + $0x8] sm:$0xff] %v513
    %1085 = vst [vmem:[#allocation2 + $0x10] sm:$0xff] %v589
    %1086 = vst [vmem:[#allocation2 + $0x18] sm:$0xff] %v594
    %1087 = vst [vmem:[#allocation2 + $0x20] sm:$0xff] %v670
    %1088 = vst [vmem:[#allocation2 + $0x28] sm:$0xff] %v675
    %1089 = vst [vmem:[#allocation2 + $0x30] sm:$0xff] %v751
    %1090 = vst [vmem:[#allocation2 + $0x38] sm:$0xff] %v756
    %1091 = vst [vmem:[#allocation2 + $0x40] sm:$0xff] %v832
    %1092 = vst [vmem:[#allocation2 + $0x48] sm:$0xff] %v837
    %1093 = vst [vmem:[#allocation2 + $0x50] sm:$0xff] %v913
    %1094 = vst [vmem:[#allocation2 + $0x58] sm:$0xff] %v918
    %1095 = vst [vmem:[#allocation2 + $0x60] sm:$0xff] %v994
    %1096 = vst [vmem:[#allocation2 + $0x68] sm:$0xff] %v999
    %1097 = vst [vmem:[#allocation2 + $0x70] sm:$0xff] %v1075
    %1098 = vst [vmem:[#allocation2 + $0x78] sm:$0xff] %v1080
    %v1099 = vlaneseq
    %v1100 = vand.u32 %v1099, 127
    %vm1101 = vcmp.ge.s32.totalorder %v1100, 1
    %v1102 = vld [vmem:[#allocation8] sm:$0xff]
    %vm1103 = vcmp.gt.f32.partialorder %v1102, 0.5
    %vm1104 = vcmp.le.s32.totalorder %v1100, 1
    %v1105 = vld [vmem:[#allocation2] sm:$0x1]
    %v1106 = vld [vmem:[#allocation2 + $0x10] sm:$0x1]
    %v1107 = vld [vmem:[#allocation2 + $0x20] sm:$0x1]
    %v1108 = vld [vmem:[#allocation2 + $0x30] sm:$0x1]
    %v1109 = vld [vmem:[#allocation2 + $0x40] sm:$0x1]
    %v1110 = vld [vmem:[#allocation2 + $0x50] sm:$0x1]
    %v1111 = vld [vmem:[#allocation2 + $0x60] sm:$0x1]
    %v1112 = vld [vmem:[#allocation2 + $0x70] sm:$0x1]
    %v1121 = vrot.slane %v1106, 7
    %vm1122 = vcmask 1041409
    %v1123 = vsel %vm1122, %v1121, %v1105
    %v1124 = vrot.slane %v1107, 6
    %vm1125 = vcmask 1042434
    %v1126 = vsel %vm1125, %v1124, %v1123
    %v1127 = vrot.slane %v1108, 5
    %vm1128 = vcmask 1043459
    %v1129 = vsel %vm1128, %v1127, %v1126
    %v1130 = vrot.slane %v1109, 4
    %vm1131 = vcmask 1044484
    %v1132 = vsel %vm1131, %v1130, %v1129
    %v1133 = vrot.slane %v1110, 3
    %vm1134 = vcmask 1045509
    %v1135 = vsel %vm1134, %v1133, %v1132
    %v1136 = vrot.slane %v1111, 2
    %vm1137 = vcmask 1046534
    %v1138 = vsel %vm1137, %v1136, %v1135
    %v1139 = vrot.slane %v1112, 1
    %vm1140 = vcmask 1047559
    %v1141 = vsel %vm1140, %v1139, %v1138
    %v1143 = vsel %vm1104, %v1141, -1e+30
    %v1144 = vld [vmem:[#allocation2 + $0x1] sm:$0x1]
    %v1145 = vld [vmem:[#allocation2 + $0x11] sm:$0x1]
    %v1146 = vld [vmem:[#allocation2 + $0x21] sm:$0x1]
    %v1147 = vld [vmem:[#allocation2 + $0x31] sm:$0x1]
    %v1148 = vld [vmem:[#allocation2 + $0x41] sm:$0x1]
    %v1149 = vld [vmem:[#allocation2 + $0x51] sm:$0x1]
    %v1150 = vld [vmem:[#allocation2 + $0x61] sm:$0x1]
    %v1151 = vld [vmem:[#allocation2 + $0x71] sm:$0x1]
    %1152 = vrot.lane.b32.xlu0 %v1143, 1
    %v1153 = vpop.permute.xlu0 %1152
    %v1154 = vsel %vm1101, %v1153, -1e+30
    %1155 = vrot.lane.b32.xlu0 %v1143, 2
    %v1156 = vpop.permute.xlu0 %1155
    %v1157 = vsel %vm1103, %v1156, -1e+30
    %v1158 = vmax.f32 %v1143, %v1154
    %v1159 = vmax.f32 %v1158, %v1157
    %v1160 = vsub.f32 %v1143, %v1159
    %v1161 = vmul.f32 %v1160, 1.442695
    %v1162 = vpow.pop %v1161
    %v1163 = vsub.f32 %v1154, %v1159
    %v1164 = vmul.f32 %v1163, 1.442695
    %v1165 = vpow.pop %v1164
    %v1166 = vadd.f32 %v1162, %v1165
    %v1167 = vsub.f32 %v1157, %v1159
    %v1168 = vmul.f32 %v1167, 1.442695
    %v1169 = vpow.pop %v1168
    %v1170 = vadd.f32 %v1166, %v1169
    %v1171 = vlog2.pop %v1170
    %v1172 = vmul.f32 %v1171, 0.6931472
    %v1173 = vadd.f32 %v1159, %v1172
    %v1182 = vrot.slane %v1145, 7
    %v1183 = vsel %vm1122, %v1182, %v1144
    %v1184 = vrot.slane %v1146, 6
    %v1185 = vsel %vm1125, %v1184, %v1183
    %v1186 = vrot.slane %v1147, 5
    %v1187 = vsel %vm1128, %v1186, %v1185
    %v1188 = vrot.slane %v1148, 4
    %v1189 = vsel %vm1131, %v1188, %v1187
    %v1190 = vrot.slane %v1149, 3
    %v1191 = vsel %vm1134, %v1190, %v1189
    %v1192 = vrot.slane %v1150, 2
    %v1193 = vsel %vm1137, %v1192, %v1191
    %v1194 = vrot.slane %v1151, 1
    %v1195 = vsel %vm1140, %v1194, %v1193
    %v1197 = vadd.f32 %v1173, %v1195
    %v1198 = vld [vmem:[#allocation2 + $0x2] sm:$0x1]
    %v1199 = vld [vmem:[#allocation2 + $0x12] sm:$0x1]
    %v1200 = vld [vmem:[#allocation2 + $0x22] sm:$0x1]
    %v1201 = vld [vmem:[#allocation2 + $0x32] sm:$0x1]
    %v1202 = vld [vmem:[#allocation2 + $0x42] sm:$0x1]
    %v1203 = vld [vmem:[#allocation2 + $0x52] sm:$0x1]
    %v1204 = vld [vmem:[#allocation2 + $0x62] sm:$0x1]
    %v1205 = vld [vmem:[#allocation2 + $0x72] sm:$0x1]
    %1206 = vrot.lane.b32.xlu0 %v1197, 1
    %v1207 = vpop.permute.xlu0 %1206
    %v1208 = vsel %vm1101, %v1207, -1e+30
    %1209 = vrot.lane.b32.xlu0 %v1197, 2
    %v1210 = vpop.permute.xlu0 %1209
    %v1211 = vsel %vm1103, %v1210, -1e+30
    %v1212 = vmax.f32 %v1197, %v1208
    %v1213 = vmax.f32 %v1212, %v1211
    %v1214 = vsub.f32 %v1197, %v1213
    %v1215 = vmul.f32 %v1214, 1.442695
    %v1216 = vpow.pop %v1215
    %v1217 = vsub.f32 %v1208, %v1213
    %v1218 = vmul.f32 %v1217, 1.442695
    %v1219 = vpow.pop %v1218
    %v1220 = vadd.f32 %v1216, %v1219
    %v1221 = vsub.f32 %v1211, %v1213
    %v1222 = vmul.f32 %v1221, 1.442695
    %v1223 = vpow.pop %v1222
    %v1224 = vadd.f32 %v1220, %v1223
    %v1225 = vlog2.pop %v1224
    %v1226 = vmul.f32 %v1225, 0.6931472
    %v1227 = vadd.f32 %v1213, %v1226
    %v1236 = vrot.slane %v1199, 7
    %v1237 = vsel %vm1122, %v1236, %v1198
    %v1238 = vrot.slane %v1200, 6
    %v1239 = vsel %vm1125, %v1238, %v1237
    %v1240 = vrot.slane %v1201, 5
    %v1241 = vsel %vm1128, %v1240, %v1239
    %v1242 = vrot.slane %v1202, 4
    %v1243 = vsel %vm1131, %v1242, %v1241
    %v1244 = vrot.slane %v1203, 3
    %v1245 = vsel %vm1134, %v1244, %v1243
    %v1246 = vrot.slane %v1204, 2
    %v1247 = vsel %vm1137, %v1246, %v1245
    %v1248 = vrot.slane %v1205, 1
    %v1249 = vsel %vm1140, %v1248, %v1247
    %v1251 = vadd.f32 %v1227, %v1249
    %v1252 = vld [vmem:[#allocation2 + $0x3] sm:$0x1]
    %v1253 = vld [vmem:[#allocation2 + $0x13] sm:$0x1]
    %v1254 = vld [vmem:[#allocation2 + $0x23] sm:$0x1]
    %v1255 = vld [vmem:[#allocation2 + $0x33] sm:$0x1]
    %v1256 = vld [vmem:[#allocation2 + $0x43] sm:$0x1]
    %v1257 = vld [vmem:[#allocation2 + $0x53] sm:$0x1]
    %v1258 = vld [vmem:[#allocation2 + $0x63] sm:$0x1]
    %v1259 = vld [vmem:[#allocation2 + $0x73] sm:$0x1]
    %1260 = vrot.lane.b32.xlu0 %v1251, 1
    %v1261 = vpop.permute.xlu0 %1260
    %v1262 = vsel %vm1101, %v1261, -1e+30
    %1263 = vrot.lane.b32.xlu0 %v1251, 2
    %v1264 = vpop.permute.xlu0 %1263
    %v1265 = vsel %vm1103, %v1264, -1e+30
    %v1266 = vmax.f32 %v1251, %v1262
    %v1267 = vmax.f32 %v1266, %v1265
    %v1268 = vsub.f32 %v1251, %v1267
    %v1269 = vmul.f32 %v1268, 1.442695
    %v1270 = vpow.pop %v1269
    %v1271 = vsub.f32 %v1262, %v1267
    %v1272 = vmul.f32 %v1271, 1.442695
    %v1273 = vpow.pop %v1272
    %v1274 = vadd.f32 %v1270, %v1273
    %v1275 = vsub.f32 %v1265, %v1267
    %v1276 = vmul.f32 %v1275, 1.442695
    %v1277 = vpow.pop %v1276
    %v1278 = vadd.f32 %v1274, %v1277
    %v1279 = vlog2.pop %v1278
    %v1280 = vmul.f32 %v1279, 0.6931472
    %v1281 = vadd.f32 %v1267, %v1280
    %v1290 = vrot.slane %v1253, 7
    %v1291 = vsel %vm1122, %v1290, %v1252
    %v1292 = vrot.slane %v1254, 6
    %v1293 = vsel %vm1125, %v1292, %v1291
    %v1294 = vrot.slane %v1255, 5
    %v1295 = vsel %vm1128, %v1294, %v1293
    %v1296 = vrot.slane %v1256, 4
    %v1297 = vsel %vm1131, %v1296, %v1295
    %v1298 = vrot.slane %v1257, 3
    %v1299 = vsel %vm1134, %v1298, %v1297
    %v1300 = vrot.slane %v1258, 2
    %v1301 = vsel %vm1137, %v1300, %v1299
    %v1302 = vrot.slane %v1259, 1
    %v1303 = vsel %vm1140, %v1302, %v1301
    %v1305 = vadd.f32 %v1281, %v1303
    %v1306 = vld [vmem:[#allocation2 + $0x4] sm:$0x1]
    %v1307 = vld [vmem:[#allocation2 + $0x14] sm:$0x1]
    %v1308 = vld [vmem:[#allocation2 + $0x24] sm:$0x1]
    %v1309 = vld [vmem:[#allocation2 + $0x34] sm:$0x1]
    %v1310 = vld [vmem:[#allocation2 + $0x44] sm:$0x1]
    %v1311 = vld [vmem:[#allocation2 + $0x54] sm:$0x1]
    %v1312 = vld [vmem:[#allocation2 + $0x64] sm:$0x1]
    %v1313 = vld [vmem:[#allocation2 + $0x74] sm:$0x1]
    %1314 = vrot.lane.b32.xlu0 %v1305, 1
    %v1315 = vpop.permute.xlu0 %1314
    %v1316 = vsel %vm1101, %v1315, -1e+30
    %1317 = vrot.lane.b32.xlu0 %v1305, 2
    %v1318 = vpop.permute.xlu0 %1317
    %v1319 = vsel %vm1103, %v1318, -1e+30
    %v1320 = vmax.f32 %v1305, %v1316
    %v1321 = vmax.f32 %v1320, %v1319
    %v1322 = vsub.f32 %v1305, %v1321
    %v1323 = vmul.f32 %v1322, 1.442695
    %v1324 = vpow.pop %v1323
    %v1325 = vsub.f32 %v1316, %v1321
    %v1326 = vmul.f32 %v1325, 1.442695
    %v1327 = vpow.pop %v1326
    %v1328 = vadd.f32 %v1324, %v1327
    %v1329 = vsub.f32 %v1319, %v1321
    %v1330 = vmul.f32 %v1329, 1.442695
    %v1331 = vpow.pop %v1330
    %v1332 = vadd.f32 %v1328, %v1331
    %v1333 = vlog2.pop %v1332
    %v1334 = vmul.f32 %v1333, 0.6931472
    %v1335 = vadd.f32 %v1321, %v1334
    %v1344 = vrot.slane %v1307, 7
    %v1345 = vsel %vm1122, %v1344, %v1306
    %v1346 = vrot.slane %v1308, 6
    %v1347 = vsel %vm1125, %v1346, %v1345
    %v1348 = vrot.slane %v1309, 5
    %v1349 = vsel %vm1128, %v1348, %v1347
    %v1350 = vrot.slane %v1310, 4
    %v1351 = vsel %vm1131, %v1350, %v1349
    %v1352 = vrot.slane %v1311, 3
    %v1353 = vsel %vm1134, %v1352, %v1351
    %v1354 = vrot.slane %v1312, 2
    %v1355 = vsel %vm1137, %v1354, %v1353
    %v1356 = vrot.slane %v1313, 1
    %v1357 = vsel %vm1140, %v1356, %v1355
    %v1359 = vadd.f32 %v1335, %v1357
    %v1360 = vld [vmem:[#allocation2 + $0x5] sm:$0x1]
    %v1361 = vld [vmem:[#allocation2 + $0x15] sm:$0x1]
    %v1362 = vld [vmem:[#allocation2 + $0x25] sm:$0x1]
    %v1363 = vld [vmem:[#allocation2 + $0x35] sm:$0x1]
    %v1364 = vld [vmem:[#allocation2 + $0x45] sm:$0x1]
    %v1365 = vld [vmem:[#allocation2 + $0x55] sm:$0x1]
    %v1366 = vld [vmem:[#allocation2 + $0x65] sm:$0x1]
    %v1367 = vld [vmem:[#allocation2 + $0x75] sm:$0x1]
    %1368 = vrot.lane.b32.xlu0 %v1359, 1
    %v1369 = vpop.permute.xlu0 %1368
    %v1370 = vsel %vm1101, %v1369, -1e+30
    %1371 = vrot.lane.b32.xlu0 %v1359, 2
    %v1372 = vpop.permute.xlu0 %1371
    %v1373 = vsel %vm1103, %v1372, -1e+30
    %v1374 = vmax.f32 %v1359, %v1370
    %v1375 = vmax.f32 %v1374, %v1373
    %v1376 = vsub.f32 %v1359, %v1375
    %v1377 = vmul.f32 %v1376, 1.442695
    %v1378 = vpow.pop %v1377
    %v1379 = vsub.f32 %v1370, %v1375
    %v1380 = vmul.f32 %v1379, 1.442695
    %v1381 = vpow.pop %v1380
    %v1382 = vadd.f32 %v1378, %v1381
    %v1383 = vsub.f32 %v1373, %v1375
    %v1384 = vmul.f32 %v1383, 1.442695
    %v1385 = vpow.pop %v1384
    %v1386 = vadd.f32 %v1382, %v1385
    %v1387 = vlog2.pop %v1386
    %v1388 = vmul.f32 %v1387, 0.6931472
    %v1389 = vadd.f32 %v1375, %v1388
    %v1398 = vrot.slane %v1361, 7
    %v1399 = vsel %vm1122, %v1398, %v1360
    %v1400 = vrot.slane %v1362, 6
    %v1401 = vsel %vm1125, %v1400, %v1399
    %v1402 = vrot.slane %v1363, 5
    %v1403 = vsel %vm1128, %v1402, %v1401
    %v1404 = vrot.slane %v1364, 4
    %v1405 = vsel %vm1131, %v1404, %v1403
    %v1406 = vrot.slane %v1365, 3
    %v1407 = vsel %vm1134, %v1406, %v1405
    %v1408 = vrot.slane %v1366, 2
    %v1409 = vsel %vm1137, %v1408, %v1407
    %v1410 = vrot.slane %v1367, 1
    %v1411 = vsel %vm1140, %v1410, %v1409
    %v1413 = vadd.f32 %v1389, %v1411
    %v1414 = vld [vmem:[#allocation2 + $0x6] sm:$0x1]
    %v1415 = vld [vmem:[#allocation2 + $0x16] sm:$0x1]
    %v1416 = vld [vmem:[#allocation2 + $0x26] sm:$0x1]
    %v1417 = vld [vmem:[#allocation2 + $0x36] sm:$0x1]
    %v1418 = vld [vmem:[#allocation2 + $0x46] sm:$0x1]
    %v1419 = vld [vmem:[#allocation2 + $0x56] sm:$0x1]
    %v1420 = vld [vmem:[#allocation2 + $0x66] sm:$0x1]
    %v1421 = vld [vmem:[#allocation2 + $0x76] sm:$0x1]
    %1422 = vrot.lane.b32.xlu0 %v1413, 1
    %v1423 = vpop.permute.xlu0 %1422
    %v1424 = vsel %vm1101, %v1423, -1e+30
    %1425 = vrot.lane.b32.xlu0 %v1413, 2
    %v1426 = vpop.permute.xlu0 %1425
    %v1427 = vsel %vm1103, %v1426, -1e+30
    %v1428 = vmax.f32 %v1413, %v1424
    %v1429 = vmax.f32 %v1428, %v1427
    %v1430 = vsub.f32 %v1413, %v1429
    %v1431 = vmul.f32 %v1430, 1.442695
    %v1432 = vpow.pop %v1431
    %v1433 = vsub.f32 %v1424, %v1429
    %v1434 = vmul.f32 %v1433, 1.442695
    %v1435 = vpow.pop %v1434
    %v1436 = vadd.f32 %v1432, %v1435
    %v1437 = vsub.f32 %v1427, %v1429
    %v1438 = vmul.f32 %v1437, 1.442695
    %v1439 = vpow.pop %v1438
    %v1440 = vadd.f32 %v1436, %v1439
    %v1441 = vlog2.pop %v1440
    %v1442 = vmul.f32 %v1441, 0.6931472
    %v1443 = vadd.f32 %v1429, %v1442
    %v1452 = vrot.slane %v1415, 7
    %v1453 = vsel %vm1122, %v1452, %v1414
    %v1454 = vrot.slane %v1416, 6
    %v1455 = vsel %vm1125, %v1454, %v1453
    %v1456 = vrot.slane %v1417, 5
    %v1457 = vsel %vm1128, %v1456, %v1455
    %v1458 = vrot.slane %v1418, 4
    %v1459 = vsel %vm1131, %v1458, %v1457
    %v1460 = vrot.slane %v1419, 3
    %v1461 = vsel %vm1134, %v1460, %v1459
    %v1462 = vrot.slane %v1420, 2
    %v1463 = vsel %vm1137, %v1462, %v1461
    %v1464 = vrot.slane %v1421, 1
    %v1465 = vsel %vm1140, %v1464, %v1463
    %v1467 = vadd.f32 %v1443, %v1465
    %v1468 = vld [vmem:[#allocation2 + $0x7] sm:$0x1]
    %v1469 = vld [vmem:[#allocation2 + $0x17] sm:$0x1]
    %v1470 = vld [vmem:[#allocation2 + $0x27] sm:$0x1]
    %v1471 = vld [vmem:[#allocation2 + $0x37] sm:$0x1]
    %v1472 = vld [vmem:[#allocation2 + $0x47] sm:$0x1]
    %v1473 = vld [vmem:[#allocation2 + $0x57] sm:$0x1]
    %v1474 = vld [vmem:[#allocation2 + $0x67] sm:$0x1]
    %v1475 = vld [vmem:[#allocation2 + $0x77] sm:$0x1]
    %1476 = vrot.lane.b32.xlu0 %v1467, 1
    %v1477 = vpop.permute.xlu0 %1476
    %v1478 = vsel %vm1101, %v1477, -1e+30
    %1479 = vrot.lane.b32.xlu0 %v1467, 2
    %v1480 = vpop.permute.xlu0 %1479
    %v1481 = vsel %vm1103, %v1480, -1e+30
    %v1482 = vmax.f32 %v1467, %v1478
    %v1483 = vmax.f32 %v1482, %v1481
    %v1484 = vsub.f32 %v1467, %v1483
    %v1485 = vmul.f32 %v1484, 1.442695
    %v1486 = vpow.pop %v1485
    %v1487 = vsub.f32 %v1478, %v1483
    %v1488 = vmul.f32 %v1487, 1.442695
    %v1489 = vpow.pop %v1488
    %v1490 = vadd.f32 %v1486, %v1489
    %v1491 = vsub.f32 %v1481, %v1483
    %v1492 = vmul.f32 %v1491, 1.442695
    %v1493 = vpow.pop %v1492
    %v1494 = vadd.f32 %v1490, %v1493
    %v1495 = vlog2.pop %v1494
    %v1496 = vmul.f32 %v1495, 0.6931472
    %v1497 = vadd.f32 %v1483, %v1496
    %v1506 = vrot.slane %v1469, 7
    %v1507 = vsel %vm1122, %v1506, %v1468
    %v1508 = vrot.slane %v1470, 6
    %v1509 = vsel %vm1125, %v1508, %v1507
    %v1510 = vrot.slane %v1471, 5
    %v1511 = vsel %vm1128, %v1510, %v1509
    %v1512 = vrot.slane %v1472, 4
    %v1513 = vsel %vm1131, %v1512, %v1511
    %v1514 = vrot.slane %v1473, 3
    %v1515 = vsel %vm1134, %v1514, %v1513
    %v1516 = vrot.slane %v1474, 2
    %v1517 = vsel %vm1137, %v1516, %v1515
    %v1518 = vrot.slane %v1475, 1
    %v1519 = vsel %vm1140, %v1518, %v1517
    %v1521 = vadd.f32 %v1497, %v1519
    %v1522 = vld [vmem:[#allocation2 + $0x8] sm:$0x1]
    %v1523 = vld [vmem:[#allocation2 + $0x18] sm:$0x1]
    %v1524 = vld [vmem:[#allocation2 + $0x28] sm:$0x1]
    %v1525 = vld [vmem:[#allocation2 + $0x38] sm:$0x1]
    %v1526 = vld [vmem:[#allocation2 + $0x48] sm:$0x1]
    %v1527 = vld [vmem:[#allocation2 + $0x58] sm:$0x1]
    %v1528 = vld [vmem:[#allocation2 + $0x68] sm:$0x1]
    %v1529 = vld [vmem:[#allocation2 + $0x78] sm:$0x1]
    %1530 = vrot.lane.b32.xlu0 %v1521, 1
    %v1531 = vpop.permute.xlu0 %1530
    %v1532 = vsel %vm1101, %v1531, -1e+30
    %1533 = vrot.lane.b32.xlu0 %v1521, 2
    %v1534 = vpop.permute.xlu0 %1533
    %v1535 = vsel %vm1103, %v1534, -1e+30
    %v1536 = vmax.f32 %v1521, %v1532
    %v1537 = vmax.f32 %v1536, %v1535
    %v1538 = vsub.f32 %v1521, %v1537
    %v1539 = vmul.f32 %v1538, 1.442695
    %v1540 = vpow.pop %v1539
    %v1541 = vsub.f32 %v1532, %v1537
    %v1542 = vmul.f32 %v1541, 1.442695
    %v1543 = vpow.pop %v1542
    %v1544 = vadd.f32 %v1540, %v1543
    %v1545 = vsub.f32 %v1535, %v1537
    %v1546 = vmul.f32 %v1545, 1.442695
    %v1547 = vpow.pop %v1546
    %v1548 = vadd.f32 %v1544, %v1547
    %v1549 = vlog2.pop %v1548
    %v1550 = vmul.f32 %v1549, 0.6931472
    %v1551 = vadd.f32 %v1537, %v1550
    %v1560 = vrot.slane %v1523, 7
    %v1561 = vsel %vm1122, %v1560, %v1522
    %v1562 = vrot.slane %v1524, 6
    %v1563 = vsel %vm1125, %v1562, %v1561
    %v1564 = vrot.slane %v1525, 5
    %v1565 = vsel %vm1128, %v1564, %v1563
    %v1566 = vrot.slane %v1526, 4
    %v1567 = vsel %vm1131, %v1566, %v1565
    %v1568 = vrot.slane %v1527, 3
    %v1569 = vsel %vm1134, %v1568, %v1567
    %v1570 = vrot.slane %v1528, 2
    %v1571 = vsel %vm1137, %v1570, %v1569
    %v1572 = vrot.slane %v1529, 1
    %v1573 = vsel %vm1140, %v1572, %v1571
    %v1575 = vadd.f32 %v1551, %v1573
    %v1576 = vld [vmem:[#allocation2 + $0x9] sm:$0x1]
    %v1577 = vld [vmem:[#allocation2 + $0x19] sm:$0x1]
    %v1578 = vld [vmem:[#allocation2 + $0x29] sm:$0x1]
    %v1579 = vld [vmem:[#allocation2 + $0x39] sm:$0x1]
    %v1580 = vld [vmem:[#allocation2 + $0x49] sm:$0x1]
    %v1581 = vld [vmem:[#allocation2 + $0x59] sm:$0x1]
    %v1582 = vld [vmem:[#allocation2 + $0x69] sm:$0x1]
    %v1583 = vld [vmem:[#allocation2 + $0x79] sm:$0x1]
    %1584 = vrot.lane.b32.xlu0 %v1575, 1
    %v1585 = vpop.permute.xlu0 %1584
    %v1586 = vsel %vm1101, %v1585, -1e+30
    %1587 = vrot.lane.b32.xlu0 %v1575, 2
    %v1588 = vpop.permute.xlu0 %1587
    %v1589 = vsel %vm1103, %v1588, -1e+30
    %v1590 = vmax.f32 %v1575, %v1586
    %v1591 = vmax.f32 %v1590, %v1589
    %v1592 = vsub.f32 %v1575, %v1591
    %v1593 = vmul.f32 %v1592, 1.442695
    %v1594 = vpow.pop %v1593
    %v1595 = vsub.f32 %v1586, %v1591
    %v1596 = vmul.f32 %v1595, 1.442695
    %v1597 = vpow.pop %v1596
    %v1598 = vadd.f32 %v1594, %v1597
    %v1599 = vsub.f32 %v1589, %v1591
    %v1600 = vmul.f32 %v1599, 1.442695
    %v1601 = vpow.pop %v1600
    %v1602 = vadd.f32 %v1598, %v1601
    %v1603 = vlog2.pop %v1602
    %v1604 = vmul.f32 %v1603, 0.6931472
    %v1605 = vadd.f32 %v1591, %v1604
    %v1614 = vrot.slane %v1577, 7
    %v1615 = vsel %vm1122, %v1614, %v1576
    %v1616 = vrot.slane %v1578, 6
    %v1617 = vsel %vm1125, %v1616, %v1615
    %v1618 = vrot.slane %v1579, 5
    %v1619 = vsel %vm1128, %v1618, %v1617
    %v1620 = vrot.slane %v1580, 4
    %v1621 = vsel %vm1131, %v1620, %v1619
    %v1622 = vrot.slane %v1581, 3
    %v1623 = vsel %vm1134, %v1622, %v1621
    %v1624 = vrot.slane %v1582, 2
    %v1625 = vsel %vm1137, %v1624, %v1623
    %v1626 = vrot.slane %v1583, 1
    %v1627 = vsel %vm1140, %v1626, %v1625
    %v1629 = vadd.f32 %v1605, %v1627
    %v1630 = vld [vmem:[#allocation2 + $0xa] sm:$0x1]
    %v1631 = vld [vmem:[#allocation2 + $0x1a] sm:$0x1]
    %v1632 = vld [vmem:[#allocation2 + $0x2a] sm:$0x1]
    %v1633 = vld [vmem:[#allocation2 + $0x3a] sm:$0x1]
    %v1634 = vld [vmem:[#allocation2 + $0x4a] sm:$0x1]
    %v1635 = vld [vmem:[#allocation2 + $0x5a] sm:$0x1]
    %v1636 = vld [vmem:[#allocation2 + $0x6a] sm:$0x1]
    %v1637 = vld [vmem:[#allocation2 + $0x7a] sm:$0x1]
    %1638 = vrot.lane.b32.xlu0 %v1629, 1
    %v1639 = vpop.permute.xlu0 %1638
    %v1640 = vsel %vm1101, %v1639, -1e+30
    %1641 = vrot.lane.b32.xlu0 %v1629, 2
    %v1642 = vpop.permute.xlu0 %1641
    %v1643 = vsel %vm1103, %v1642, -1e+30
    %v1644 = vmax.f32 %v1629, %v1640
    %v1645 = vmax.f32 %v1644, %v1643
    %v1646 = vsub.f32 %v1629, %v1645
    %v1647 = vmul.f32 %v1646, 1.442695
    %v1648 = vpow.pop %v1647
    %v1649 = vsub.f32 %v1640, %v1645
    %v1650 = vmul.f32 %v1649, 1.442695
    %v1651 = vpow.pop %v1650
    %v1652 = vadd.f32 %v1648, %v1651
    %v1653 = vsub.f32 %v1643, %v1645
    %v1654 = vmul.f32 %v1653, 1.442695
    %v1655 = vpow.pop %v1654
    %v1656 = vadd.f32 %v1652, %v1655
    %v1657 = vlog2.pop %v1656
    %v1658 = vmul.f32 %v1657, 0.6931472
    %v1659 = vadd.f32 %v1645, %v1658
    %v1668 = vrot.slane %v1631, 7
    %v1669 = vsel %vm1122, %v1668, %v1630
    %v1670 = vrot.slane %v1632, 6
    %v1671 = vsel %vm1125, %v1670, %v1669
    %v1672 = vrot.slane %v1633, 5
    %v1673 = vsel %vm1128, %v1672, %v1671
    %v1674 = vrot.slane %v1634, 4
    %v1675 = vsel %vm1131, %v1674, %v1673
    %v1676 = vrot.slane %v1635, 3
    %v1677 = vsel %vm1134, %v1676, %v1675
    %v1678 = vrot.slane %v1636, 2
    %v1679 = vsel %vm1137, %v1678, %v1677
    %v1680 = vrot.slane %v1637, 1
    %v1681 = vsel %vm1140, %v1680, %v1679
    %v1683 = vadd.f32 %v1659, %v1681
    %v1684 = vld [vmem:[#allocation2 + $0xb] sm:$0x1]
    %v1685 = vld [vmem:[#allocation2 + $0x1b] sm:$0x1]
    %v1686 = vld [vmem:[#allocation2 + $0x2b] sm:$0x1]
    %v1687 = vld [vmem:[#allocation2 + $0x3b] sm:$0x1]
    %v1688 = vld [vmem:[#allocation2 + $0x4b] sm:$0x1]
    %v1689 = vld [vmem:[#allocation2 + $0x5b] sm:$0x1]
    %v1690 = vld [vmem:[#allocation2 + $0x6b] sm:$0x1]
    %v1691 = vld [vmem:[#allocation2 + $0x7b] sm:$0x1]
    %1692 = vrot.lane.b32.xlu0 %v1683, 1
    %v1693 = vpop.permute.xlu0 %1692
    %v1694 = vsel %vm1101, %v1693, -1e+30
    %1695 = vrot.lane.b32.xlu0 %v1683, 2
    %v1696 = vpop.permute.xlu0 %1695
    %v1697 = vsel %vm1103, %v1696, -1e+30
    %v1698 = vmax.f32 %v1683, %v1694
    %v1699 = vmax.f32 %v1698, %v1697
    %v1700 = vsub.f32 %v1683, %v1699
    %v1701 = vmul.f32 %v1700, 1.442695
    %v1702 = vpow.pop %v1701
    %v1703 = vsub.f32 %v1694, %v1699
    %v1704 = vmul.f32 %v1703, 1.442695
    %v1705 = vpow.pop %v1704
    %v1706 = vadd.f32 %v1702, %v1705
    %v1707 = vsub.f32 %v1697, %v1699
    %v1708 = vmul.f32 %v1707, 1.442695
    %v1709 = vpow.pop %v1708
    %v1710 = vadd.f32 %v1706, %v1709
    %v1711 = vlog2.pop %v1710
    %v1712 = vmul.f32 %v1711, 0.6931472
    %v1713 = vadd.f32 %v1699, %v1712
    %v1722 = vrot.slane %v1685, 7
    %v1723 = vsel %vm1122, %v1722, %v1684
    %v1724 = vrot.slane %v1686, 6
    %v1725 = vsel %vm1125, %v1724, %v1723
    %v1726 = vrot.slane %v1687, 5
    %v1727 = vsel %vm1128, %v1726, %v1725
    %v1728 = vrot.slane %v1688, 4
    %v1729 = vsel %vm1131, %v1728, %v1727
    %v1730 = vrot.slane %v1689, 3
    %v1731 = vsel %vm1134, %v1730, %v1729
    %v1732 = vrot.slane %v1690, 2
    %v1733 = vsel %vm1137, %v1732, %v1731
    %v1734 = vrot.slane %v1691, 1
    %v1735 = vsel %vm1140, %v1734, %v1733
    %v1737 = vadd.f32 %v1713, %v1735
    %v1738 = vld [vmem:[#allocation2 + $0xc] sm:$0x1]
    %v1739 = vld [vmem:[#allocation2 + $0x1c] sm:$0x1]
    %v1740 = vld [vmem:[#allocation2 + $0x2c] sm:$0x1]
    %v1741 = vld [vmem:[#allocation2 + $0x3c] sm:$0x1]
    %v1742 = vld [vmem:[#allocation2 + $0x4c] sm:$0x1]
    %v1743 = vld [vmem:[#allocation2 + $0x5c] sm:$0x1]
    %v1744 = vld [vmem:[#allocation2 + $0x6c] sm:$0x1]
    %v1745 = vld [vmem:[#allocation2 + $0x7c] sm:$0x1]
    %1746 = vrot.lane.b32.xlu0 %v1737, 1
    %v1747 = vpop.permute.xlu0 %1746
    %v1748 = vsel %vm1101, %v1747, -1e+30
    %1749 = vrot.lane.b32.xlu0 %v1737, 2
    %v1750 = vpop.permute.xlu0 %1749
    %v1751 = vsel %vm1103, %v1750, -1e+30
    %v1752 = vmax.f32 %v1737, %v1748
    %v1753 = vmax.f32 %v1752, %v1751
    %v1754 = vsub.f32 %v1737, %v1753
    %v1755 = vmul.f32 %v1754, 1.442695
    %v1756 = vpow.pop %v1755
    %v1757 = vsub.f32 %v1748, %v1753
    %v1758 = vmul.f32 %v1757, 1.442695
    %v1759 = vpow.pop %v1758
    %v1760 = vadd.f32 %v1756, %v1759
    %v1761 = vsub.f32 %v1751, %v1753
    %v1762 = vmul.f32 %v1761, 1.442695
    %v1763 = vpow.pop %v1762
    %v1764 = vadd.f32 %v1760, %v1763
    %v1765 = vlog2.pop %v1764
    %v1766 = vmul.f32 %v1765, 0.6931472
    %v1767 = vadd.f32 %v1753, %v1766
    %v1776 = vrot.slane %v1739, 7
    %v1777 = vsel %vm1122, %v1776, %v1738
    %v1778 = vrot.slane %v1740, 6
    %v1779 = vsel %vm1125, %v1778, %v1777
    %v1780 = vrot.slane %v1741, 5
    %v1781 = vsel %vm1128, %v1780, %v1779
    %v1782 = vrot.slane %v1742, 4
    %v1783 = vsel %vm1131, %v1782, %v1781
    %v1784 = vrot.slane %v1743, 3
    %v1785 = vsel %vm1134, %v1784, %v1783
    %v1786 = vrot.slane %v1744, 2
    %v1787 = vsel %vm1137, %v1786, %v1785
    %v1788 = vrot.slane %v1745, 1
    %v1789 = vsel %vm1140, %v1788, %v1787
    %v1791 = vadd.f32 %v1767, %v1789
    %v1792 = vld [vmem:[#allocation2 + $0xd] sm:$0x1]
    %v1793 = vld [vmem:[#allocation2 + $0x1d] sm:$0x1]
    %v1794 = vld [vmem:[#allocation2 + $0x2d] sm:$0x1]
    %v1795 = vld [vmem:[#allocation2 + $0x3d] sm:$0x1]
    %v1796 = vld [vmem:[#allocation2 + $0x4d] sm:$0x1]
    %v1797 = vld [vmem:[#allocation2 + $0x5d] sm:$0x1]
    %v1798 = vld [vmem:[#allocation2 + $0x6d] sm:$0x1]
    %v1799 = vld [vmem:[#allocation2 + $0x7d] sm:$0x1]
    %1800 = vrot.lane.b32.xlu0 %v1791, 1
    %v1801 = vpop.permute.xlu0 %1800
    %v1802 = vsel %vm1101, %v1801, -1e+30
    %1803 = vrot.lane.b32.xlu0 %v1791, 2
    %v1804 = vpop.permute.xlu0 %1803
    %v1805 = vsel %vm1103, %v1804, -1e+30
    %v1806 = vmax.f32 %v1791, %v1802
    %v1807 = vmax.f32 %v1806, %v1805
    %v1808 = vsub.f32 %v1791, %v1807
    %v1809 = vmul.f32 %v1808, 1.442695
    %v1810 = vpow.pop %v1809
    %v1811 = vsub.f32 %v1802, %v1807
    %v1812 = vmul.f32 %v1811, 1.442695
    %v1813 = vpow.pop %v1812
    %v1814 = vadd.f32 %v1810, %v1813
    %v1815 = vsub.f32 %v1805, %v1807
    %v1816 = vmul.f32 %v1815, 1.442695
    %v1817 = vpow.pop %v1816
    %v1818 = vadd.f32 %v1814, %v1817
    %v1819 = vlog2.pop %v1818
    %v1820 = vmul.f32 %v1819, 0.6931472
    %v1821 = vadd.f32 %v1807, %v1820
    %v1830 = vrot.slane %v1793, 7
    %v1831 = vsel %vm1122, %v1830, %v1792
    %v1832 = vrot.slane %v1794, 6
    %v1833 = vsel %vm1125, %v1832, %v1831
    %v1834 = vrot.slane %v1795, 5
    %v1835 = vsel %vm1128, %v1834, %v1833
    %v1836 = vrot.slane %v1796, 4
    %v1837 = vsel %vm1131, %v1836, %v1835
    %v1838 = vrot.slane %v1797, 3
    %v1839 = vsel %vm1134, %v1838, %v1837
    %v1840 = vrot.slane %v1798, 2
    %v1841 = vsel %vm1137, %v1840, %v1839
    %v1842 = vrot.slane %v1799, 1
    %v1843 = vsel %vm1140, %v1842, %v1841
    %v1845 = vadd.f32 %v1821, %v1843
    %v1846 = vld [vmem:[#allocation2 + $0xe] sm:$0x1]
    %v1847 = vld [vmem:[#allocation2 + $0x1e] sm:$0x1]
    %v1848 = vld [vmem:[#allocation2 + $0x2e] sm:$0x1]
    %v1849 = vld [vmem:[#allocation2 + $0x3e] sm:$0x1]
    %v1850 = vld [vmem:[#allocation2 + $0x4e] sm:$0x1]
    %v1851 = vld [vmem:[#allocation2 + $0x5e] sm:$0x1]
    %v1852 = vld [vmem:[#allocation2 + $0x6e] sm:$0x1]
    %v1853 = vld [vmem:[#allocation2 + $0x7e] sm:$0x1]
    %1854 = vrot.lane.b32.xlu0 %v1845, 1
    %v1855 = vpop.permute.xlu0 %1854
    %v1856 = vsel %vm1101, %v1855, -1e+30
    %1857 = vrot.lane.b32.xlu0 %v1845, 2
    %v1858 = vpop.permute.xlu0 %1857
    %v1859 = vsel %vm1103, %v1858, -1e+30
    %v1860 = vmax.f32 %v1845, %v1856
    %v1861 = vmax.f32 %v1860, %v1859
    %v1862 = vsub.f32 %v1845, %v1861
    %v1863 = vmul.f32 %v1862, 1.442695
    %v1864 = vpow.pop %v1863
    %v1865 = vsub.f32 %v1856, %v1861
    %v1866 = vmul.f32 %v1865, 1.442695
    %v1867 = vpow.pop %v1866
    %v1868 = vadd.f32 %v1864, %v1867
    %v1869 = vsub.f32 %v1859, %v1861
    %v1870 = vmul.f32 %v1869, 1.442695
    %v1871 = vpow.pop %v1870
    %v1872 = vadd.f32 %v1868, %v1871
    %v1873 = vlog2.pop %v1872
    %v1874 = vmul.f32 %v1873, 0.6931472
    %v1875 = vadd.f32 %v1861, %v1874
    %v1884 = vrot.slane %v1847, 7
    %v1885 = vsel %vm1122, %v1884, %v1846
    %v1886 = vrot.slane %v1848, 6
    %v1887 = vsel %vm1125, %v1886, %v1885
    %v1888 = vrot.slane %v1849, 5
    %v1889 = vsel %vm1128, %v1888, %v1887
    %v1890 = vrot.slane %v1850, 4
    %v1891 = vsel %vm1131, %v1890, %v1889
    %v1892 = vrot.slane %v1851, 3
    %v1893 = vsel %vm1134, %v1892, %v1891
    %v1894 = vrot.slane %v1852, 2
    %v1895 = vsel %vm1137, %v1894, %v1893
    %v1896 = vrot.slane %v1853, 1
    %v1897 = vsel %vm1140, %v1896, %v1895
    %v1899 = vadd.f32 %v1875, %v1897
    %v1900 = vld [vmem:[#allocation2 + $0xf] sm:$0x1]
    %v1901 = vld [vmem:[#allocation2 + $0x1f] sm:$0x1]
    %v1902 = vld [vmem:[#allocation2 + $0x2f] sm:$0x1]
    %v1903 = vld [vmem:[#allocation2 + $0x3f] sm:$0x1]
    %v1904 = vld [vmem:[#allocation2 + $0x4f] sm:$0x1]
    %v1905 = vld [vmem:[#allocation2 + $0x5f] sm:$0x1]
    %v1906 = vld [vmem:[#allocation2 + $0x6f] sm:$0x1]
    %v1907 = vld [vmem:[#allocation2 + $0x7f] sm:$0x1]
    %1908 = vrot.lane.b32.xlu0 %v1899, 1
    %v1909 = vpop.permute.xlu0 %1908
    %v1910 = vsel %vm1101, %v1909, -1e+30
    %1911 = vrot.lane.b32.xlu0 %v1899, 2
    %v1912 = vpop.permute.xlu0 %1911
    %v1913 = vsel %vm1103, %v1912, -1e+30
    %v1914 = vmax.f32 %v1899, %v1910
    %v1915 = vmax.f32 %v1914, %v1913
    %v1916 = vsub.f32 %v1899, %v1915
    %v1917 = vmul.f32 %v1916, 1.442695
    %v1918 = vpow.pop %v1917
    %v1919 = vsub.f32 %v1910, %v1915
    %v1920 = vmul.f32 %v1919, 1.442695
    %v1921 = vpow.pop %v1920
    %v1922 = vadd.f32 %v1918, %v1921
    %v1923 = vsub.f32 %v1913, %v1915
    %v1924 = vmul.f32 %v1923, 1.442695
    %v1925 = vpow.pop %v1924
    %v1926 = vadd.f32 %v1922, %v1925
    %v1927 = vlog2.pop %v1926
    %v1928 = vmul.f32 %v1927, 0.6931472
    %v1929 = vadd.f32 %v1915, %v1928
    %v1938 = vrot.slane %v1901, 7
    %v1939 = vsel %vm1122, %v1938, %v1900
    %v1940 = vrot.slane %v1902, 6
    %v1941 = vsel %vm1125, %v1940, %v1939
    %v1942 = vrot.slane %v1903, 5
    %v1943 = vsel %vm1128, %v1942, %v1941
    %v1944 = vrot.slane %v1904, 4
    %v1945 = vsel %vm1131, %v1944, %v1943
    %v1946 = vrot.slane %v1905, 3
    %v1947 = vsel %vm1134, %v1946, %v1945
    %v1948 = vrot.slane %v1906, 2
    %v1949 = vsel %vm1137, %v1948, %v1947
    %v1950 = vrot.slane %v1907, 1
    %v1951 = vsel %vm1140, %v1950, %v1949
    %v1953 = vadd.f32 %v1929, %v1951
    %v1954 = vld [vmem:[#allocation9] sm:$0xff]
    %vm1955 = vcmp.gt.f32.partialorder %v1954, 0.5
    %v1956 = vsel %vm1955, %v1953, -1e+30
    %1957 = vmax.xlane.f32.xlu0 %v1956
    %v1958 = vpop.xlane.xlu0 %1957
    %v1959 = vsub.f32 %v1956, %v1958
    %v1960 = vmul.f32 %v1959, 1.442695
    %v1961 = vpow.pop %v1960
    %1962 = vadd.xlane.f32.xlu0 %v1961
    %v1963 = vpop.xlane.xlu0 %1962
    %v1964 = vlog2.pop %v1963
    %v1965 = vmul.f32 %v1964, 0.6931472
    %v1966 = vadd.f32 %v1958, %v1965
    %v1967 = vsub.f32 0.0, %v1966
    %1968 = vst [vmem:[#allocation11] sm:$0xff] %v1967
    // Predicated region
    $region34: #{tpu_custom_call.1} parent=1 // pred_check
      _
    $region35: #{tpu_custom_call.1} parent=1 // pred_check_branch
      %1970 = sbr.rel (0) target = $region37
    $region36: #{tpu_custom_call.1} parent=1 // pred_region
      %s1972 = ssub.s32 128, 128
      %1973 = vsyncadd [#allocation5], %s1972
      %s1975 = sshll.u32 [#allocation11], 4
      %s1976 = int_to_ptr.vmem [resolvable:$true] %s1975
      %1978 = dma.vmem_to_hbm [thread:$0]  %s1976, 128, %s4, [#allocation5]
    $region37: #{tpu_custom_call.1} parent=1 // pred_fallthru
      _
    // Predicated region
    $region38: #{tpu_custom_call.1} parent=1 // pred_check
      _
    $region39: #{tpu_custom_call.1} parent=1 // pred_check_branch
      %1980 = sbr.rel (0) target = $region41
    $region40: #{tpu_custom_call.1} parent=1 // pred_region
      %1981 = dma.done [#allocation5], 128
    $region41: #{tpu_custom_call.1} parent=1 // pred_fallthru
      _
    %1982 = vsyncpa [#allocation4], 1
    %1983 = vsyncpa [#allocation7], 1
    %1984 = vsyncpa [#allocation10], 1
    %1985 = vsyncpa [#allocation5], 1

</llo_original>
